<compile_context>
chip_gen: v7x
topology: tpu7x:2x2x1
jax: 0.10.0
libtpu: 0.0.40
codegen_flags: <defaults>
</compile_context>

<pallas_src>
import jax
import jax.numpy as jnp
from jax.experimental import pallas as pl
from jax.experimental.pallas import tpu as pltpu


# ----------------------------------------------------------------------------
# Kernels
# ----------------------------------------------------------------------------
def _prep_mxu_operands(x_raw, w_raw):
    """ReLU the activation and pick MXU input dtypes from the weight storage.

    f32 weight  -> f32 x f32 matmul (bit-faithful to the PyTorch module).
    bf16 weight -> cast the activation to bf16 too: single-pass bf16 MXU
                   matmul, f32 accumulation via preferred_element_type.
    int8 / fp8  -> dequantize the weight to bf16 in-kernel (VPU work, free
                   under the HBM bound) and run the bf16 matmul.
    """
    x = jnp.maximum(x_raw, 0.0)
    w = w_raw
    if w.dtype == jnp.float32:
        return x, w
    if w.dtype != jnp.bfloat16:
        w = w.astype(jnp.float32).astype(jnp.bfloat16)
    return x.astype(jnp.bfloat16), w


def _embed_fused_kernel(x_ref, w_ref, s_ref, b_ref, o_ref):
    """Single invocation: whole x, weight, scale and bias resident in VMEM."""
    x, w = _prep_mxu_operands(x_ref[...], w_ref[...])
    acc = jnp.dot(x, w, preferred_element_type=jnp.float32)
    o_ref[...] = (acc * s_ref[...] + b_ref[...]).astype(o_ref.dtype)


def _make_tiled_kernel(tk, x_resident):
    """Generic path: grid = (N//tn, K//tk), K innermost ("arbitrary")."""

    def kernel(x_ref, w_ref, s_ref, b_ref, o_ref, acc_ref):
        k = pl.program_id(1)

        @pl.when(k == 0)
        def _init():
            acc_ref[...] = jnp.zeros_like(acc_ref)

        if x_resident:
            # Whole activation kept in VMEM (fetched from HBM once); slice the
            # current K chunk here.  ReLU recompute is free VPU work.
            koff = pl.multiple_of(k * tk, tk)
            x_raw = x_ref[:, pl.ds(koff, tk)]
        else:
            x_raw = x_ref[...]

        x, w = _prep_mxu_operands(x_raw, w_ref[...])
        acc_ref[...] += jnp.dot(x, w, preferred_element_type=jnp.float32)

        @pl.when(k == pl.num_programs(1) - 1)
        def _finalize():
            o_ref[...] = (acc_ref[...] * s_ref[...]
                          + b_ref[...]).astype(o_ref.dtype)

    return kernel


# ----------------------------------------------------------------------------
# Helpers
# ----------------------------------------------------------------------------
def _vmem_capacity_bytes():
    try:
        return int(pltpu.get_tpu_info().vmem_capacity_bytes)
    except Exception:
        return 64 << 20  # conservative fallback (v7x per-TC VMEM)


def quantize_weight_int8(weight):
    """Per-output-column symmetric int8 quantization: weight ~= w_q * scale."""
    amax = jnp.max(jnp.abs(weight), axis=0, keepdims=True)          # (1, N)
    scale = jnp.where(amax > 0, amax / 127.0, 1.0).astype(jnp.float32)
    w_q = jnp.clip(jnp.round(weight / scale), -127, 127).astype(jnp.int8)
    return w_q, scale


# ----------------------------------------------------------------------------
# Wrapper
# ----------------------------------------------------------------------------
def embedding_layer(pool, weight, bias, *, weight_dtype=None, weight_scale=None,
                    tk=None, tn=None, force_tiled=False):
    """pool: (B, C, H, W) with C*H*W == K; weight: (K, N); bias: (N,).

    Computes ReLU(flatten(pool)) @ weight + bias, matching the PyTorch module
    (weight stored as (in, out), i.e. nn.Linear.weight transposed).

    weight_dtype (optional narrow storage for the dominant HBM read):
      jnp.bfloat16       -> 2x smaller read, bf16 MXU matmul (f32 accumulate).
      jnp.int8           -> 4x smaller read; per-column scales computed here
                            (best on v5e/v6e, which have integer MXU paths).
      jnp.float8_e4m3fn  -> 4x smaller read (preferred on v7x: no int MXU).
    weight_scale: optional precomputed (1, N) per-column scale when `weight`
      is already quantized.
    """
    B = pool.shape[0]
    x = pool.reshape(B, -1)                 # == torch.flatten(1) (row-major)
    K = x.shape[1]
    Kw, N = weight.shape
    assert Kw == K, f"weight in_features {Kw} != flattened dim {K}"

    # ---- weight storage dtype / quantization --------------------------------
    if weight_dtype is not None and weight.dtype != jnp.dtype(weight_dtype):
        if jnp.dtype(weight_dtype) == jnp.dtype(jnp.int8):
            assert weight_scale is None, "pass either float weight or (w_q, scale)"
            weight, weight_scale = quantize_weight_int8(weight)
        else:
            weight = weight.astype(weight_dtype)   # bf16 / fp8: direct cast
    if weight_scale is None:
        scale2d = jnp.ones((1, N), jnp.float32)
    else:
        scale2d = weight_scale.reshape(1, N).astype(jnp.float32)
    bias2d = bias.reshape(1, N).astype(jnp.float32)

    w_itemsize = jnp.dtype(weight.dtype).itemsize
    x_itemsize = jnp.dtype(x.dtype).itemsize
    out_itemsize = x_itemsize
    cost = pl.CostEstimate(
        flops=int(2 * B * K * N),
        transcendentals=0,
        bytes_accessed=int(B * K * x_itemsize + K * N * w_itemsize
                           + 2 * N * 4 + B * N * out_itemsize),
    )

    vmem_cap = _vmem_capacity_bytes()
    small_vmem = vmem_cap <= (64 << 20)     # v7x: 64 MiB/TC vs 128 MiB v5e/v6e

    # ---------------- single-shot fused path ---------------------------------
    # One big weight DMA runs at ~100% of HBM roofline and avoids per-step grid
    # overhead, so take this path whenever everything comfortably fits VMEM.
    fused_budget = (16 << 20) if small_vmem else (32 << 20)
    resident_bytes = (K * N * w_itemsize
                      + B * K * x_itemsize
                      + B * N * (out_itemsize + 4)
                      + 2 * N * 4)
    if not force_tiled and resident_bytes <= fused_budget:
        compiler_params = None
        if resident_bytes > (12 << 20):
            # Raise the scoped-VMEM limit when a large fused weight would
            # exceed the per-generation default (16 MiB v5e, 32 MiB v6e/v7x).
            compiler_params = pltpu.CompilerParams(
                vmem_limit_bytes=int(min(vmem_cap, 2 * resident_bytes)))
        return pl.pallas_call(
            _embed_fused_kernel,
            out_shape=jax.ShapeDtypeStruct((B, N), x.dtype),
            compiler_params=compiler_params,
            cost_estimate=cost,
        )(x, weight, scale2d, bias2d)

    # ---------------- generic tiled path (large K*N) -------------------------
    if tn is None:
        if N <= 1024:
            tn = N
        else:
            tn = next((c for c in (1024, 512, 256, 128) if N % c == 0), N)

    # Keep the whole activation resident across the grid when it is small: it
    # is then DMA'd from HBM exactly once instead of once per (n, k) step.
    x_resident = (B * K * x_itemsize) <= (4 << 20)

    per_buf_cap = 4 << 20                         # per pipeline buffer (v7x-safe)
    tiled_budget = (16 << 20) if small_vmem else (24 << 20)

    def _tiled_footprint(tk_):
        w_bufs = 2 * tk_ * tn * w_itemsize                         # double-buffered
        x_bufs = (B * K * x_itemsize if x_resident
                  else 2 * B * tk_ * x_itemsize)
        io = B * tn * 4 + 2 * B * tn * out_itemsize + 4 * tn * 4   # acc + out + scale/bias
        return w_bufs + x_bufs + io

    if tk is None:
        # No hard tk cap: a byte budget (weight + activation + acc + out)
        # governs.  Bigger tiles amortize the ~0.35us/step grid overhead and
        # keep DMAs large; 1-4 MiB weight tiles already hit ~85% of the HBM
        # roofline.
        tk = K
        while (tk % 2 == 0 and tk > 128
               and (tk * tn * w_itemsize > per_buf_cap
                    or _tiled_footprint(tk) > tiled_budget)):
            tk //= 2

    assert K % tk == 0 and N % tn == 0, (K, tk, N, tn)
    assert (tk % 128 == 0 or tk == K) and (tn % 128 == 0 or tn == N), (tk, tn)

    if x_resident:
        x_spec = pl.BlockSpec((B, K), lambda n, k: (0, 0))     # fetched once
    else:
        x_spec = pl.BlockSpec((B, tk), lambda n, k: (0, k))    # streamed per step

    grid = (N // tn, K // tk)
    return pl.pallas_call(
        _make_tiled_kernel(tk, x_resident),
        out_shape=jax.ShapeDtypeStruct((B, N), x.dtype),
        grid_spec=pltpu.PrefetchScalarGridSpec(
            num_scalar_prefetch=0,
            grid=grid,
            in_specs=[
                x_spec,                                        # activation
                pl.BlockSpec((tk, tn), lambda n, k: (k, n)),   # weight tile
                pl.BlockSpec((1, tn), lambda n, k: (0, n)),    # per-column scale
                pl.BlockSpec((1, tn), lambda n, k: (0, n)),    # bias tile
            ],
            out_specs=pl.BlockSpec((B, tn), lambda n, k: (0, n)),
            scratch_shapes=[pltpu.VMEM((B, tn), jnp.float32)],
        ),
        compiler_params=pltpu.CompilerParams(
            # N axis "parallel" (shardable across v7x's two TCs when N//tn > 1);
            # K is the reduction -> "arbitrary", innermost.
            dimension_semantics=("parallel", "arbitrary"),
            vmem_limit_bytes=int(min(vmem_cap,
                                     max(32 << 20, 2 * _tiled_footprint(tk)))),
        ),
        cost_estimate=cost,
    )(x, weight, scale2d, bias2d)


# ----------------------------------------------------------------------------
# Self-test
# ----------------------------------------------------------------------------
if __name__ == "__main__":
    embed_size = 128
    in_features = 4096

    key = jax.random.PRNGKey(0)
    k_pool, k_w, k_b = jax.random.split(key, 3)

    # Small input consistent with the module: (B, C, H, W) flattening to 4096.
    B, C, H, W = 2, 256, 4, 4
    pool = jax.random.normal(k_pool, (B, C, H, W), dtype=jnp.float32)

    bound = 1.0 / (in_features ** 0.5)
    weight = jax.random.uniform(k_w, (in_features, embed_size),
                                minval=-bound, maxval=bound, dtype=jnp.float32)
    bias = jax.random.uniform(k_b, (embed_size,),
                              minval=-bound, maxval=bound, dtype=jnp.float32)

    x_relu = jnp.maximum(pool.reshape(B, -1), 0.0)
    ref = x_relu @ weight + bias

    # 1) Default single-shot fused path (the shipped K=4096, N=128 config).
    out = jax.block_until_ready(embedding_layer(pool, weight, bias))
    assert out.shape == (B, embed_size)
    assert jnp.allclose(out, ref, atol=1e-4, rtol=1e-4)

    # 2) Forced tiled path: validates the (parallel-N, arbitrary-K) grid, the
    #    resident-activation BlockSpec + in-kernel pl.ds slicing, and the
    #    scale/bias finalize.
    out_tiled = jax.block_until_ready(
        embedding_layer(pool, weight, bias, force_tiled=True, tk=1024, tn=128))
    assert jnp.allclose(out_tiled, ref, atol=1e-4, rtol=1e-4)

    # 3) bf16 weight storage: activation is also cast to bf16 in-kernel so the
    #    MXU runs a single-pass bf16 matmul with f32 accumulation.
    out_bf16 = jax.block_until_ready(
        embedding_layer(pool, weight, bias, weight_dtype=jnp.bfloat16))
    x_bf = x_relu.astype(jnp.bfloat16).astype(jnp.float32)
    ref_bf16 = x_bf @ weight.astype(jnp.bfloat16).astype(jnp.float32) + bias
    assert jnp.allclose(out_bf16, ref_bf16, atol=1e-2, rtol=1e-2)

    # 4) int8 weight storage with per-output-column scales (biggest HBM win on
    #    v5e/v6e; on v7x prefer weight_dtype=jnp.float8_e4m3fn instead).
    out_i8 = jax.block_until_ready(
        embedding_layer(pool, weight, bias, weight_dtype=jnp.int8))
    w_q, s = quantize_weight_int8(weight)
    ref_i8 = (x_bf @ w_q.astype(jnp.float32)) * s + bias   # bf16(w_q) is exact
    assert jnp.allclose(out_i8, ref_i8, atol=1e-2, rtol=1e-2)

    print("KERNEL_OK")
</pallas_src>

<mosaic_0001>
module attributes {stable_mosaic.version = 11 : i64} {
  func.func @_embed_fused_kernel(%arg0: memref<2x4096xf32, #tpu.memory_space<vmem>>, %arg1: memref<4096x128xf32, #tpu.memory_space<vmem>>, %arg2: memref<1x128xf32, #tpu.memory_space<vmem>>, %arg3: memref<1x128xf32, #tpu.memory_space<vmem>>, %arg4: memref<2x128xf32, #tpu.memory_space<vmem>>) attributes {dimension_semantics = [], scalar_prefetch = 0 : i64, scratch_operands = 0 : i64, tpu.core_type = #tpu.core_type<tc>} {
    %c0 = arith.constant 0 : index
    %c0_0 = arith.constant 0 : index
    %0 = vector.load %arg0[%c0, %c0_0] : memref<2x4096xf32, #tpu.memory_space<vmem>>, vector<2x4096xf32>
    %c0_1 = arith.constant 0 : index
    %c0_2 = arith.constant 0 : index
    %1 = vector.load %arg1[%c0_1, %c0_2] : memref<4096x128xf32, #tpu.memory_space<vmem>>, vector<4096x128xf32>
    %cst = arith.constant 0.000000e+00 : f32
    %2 = vector.broadcast %cst : f32 to vector<2x4096xf32>
    %3 = arith.maximumf %0, %2 : vector<2x4096xf32>
    %cst_3 = arith.constant dense<0.000000e+00> : vector<2x128xf32>
    %4 = tpu.matmul %3, %1, %cst_3 {dimension_numbers = #tpu.dot_dimension_numbers<[1], [0], [0], [1], [0, 0, 1, 1], [], []>} : vector<2x4096xf32>, vector<4096x128xf32>, vector<2x128xf32> -> vector<2x128xf32>
    %c0_4 = arith.constant 0 : index
    %c0_5 = arith.constant 0 : index
    %5 = vector.load %arg2[%c0_4, %c0_5] : memref<1x128xf32, #tpu.memory_space<vmem>>, vector<1x128xf32>
    %6 = vector.broadcast %5 : vector<1x128xf32> to vector<2x128xf32>
    %7 = arith.mulf %4, %6 : vector<2x128xf32>
    %c0_6 = arith.constant 0 : index
    %c0_7 = arith.constant 0 : index
    %8 = vector.load %arg3[%c0_6, %c0_7] : memref<1x128xf32, #tpu.memory_space<vmem>>, vector<1x128xf32>
    %9 = vector.broadcast %8 : vector<1x128xf32> to vector<2x128xf32>
    %10 = arith.addf %7, %9 : vector<2x128xf32>
    %c0_8 = arith.constant 0 : index
    %c0_9 = arith.constant 0 : index
    %11 = vector.load %arg4[%c0_8, %c0_9] : memref<2x128xf32, #tpu.memory_space<vmem>>, vector<2x128xf32>
    tpu.vector_store %arg4[%c0_8, %c0_9], %10 {strides = array<i32>} : memref<2x128xf32, #tpu.memory_space<vmem>>, vector<2x128xf32>,
    return
  }
}

</mosaic_0001>

<llo_original>
// kernel: tpu_custom_call.1
$region0: #{tpu_custom_call.1}
  #allocation0 [shape = 'u32[]', space=smem, size = 0x4, offset = 0x4, fixed_abs, tag = 'smem constant byte address 0x4 - core index']
  #allocation1 [shape = 'u32[144,128]{1,0:T(1,128)}', space=vmem, size = 0x12000, scoped, tag = 'internal scratch']
  %s0 = inlined_call_operand.hbm [shape: f32[2,4096], index: 0, kind: input, shape index: {}]
  %s1 = inlined_call_operand.hbm [shape: f32[4096,128], index: 1, kind: input, shape index: {}]
  %s2 = inlined_call_operand.hbm [shape: f32[1,128], index: 2, kind: input, shape index: {}]
  %s3 = inlined_call_operand.hbm [shape: f32[1,128], index: 3, kind: input, shape index: {}]
  %s4 = inlined_call_operand.hbm [shape: f32[2,128], index: 4, kind: output, shape index: {}]
  %s5 = sld [smem:[#allocation0]]
  $region42: #{tpu_custom_call.1} parent=0
    _
  %s7 = ssub.s32 1, %s5
  %s8 = scalar_select 0, %s7, %s5
  $region1: #{tpu_custom_call.1} parent=0
    #allocation2 [shape = 'u8[32768]{0}', space=vmem, size = 0x8000, scoped, tag = 'input window, operand 0, single buffered']
    #allocation3 [shape = 's32[1]{0}', space=sflag, size = 0x4, scoped, tag = 'scoped memory for tpu_custom_call.1']
    #allocation4 [shape = 's32[1]{0}', space=sflag, size = 0x4, scoped, tag = 'scoped memory for tpu_custom_call.1']
    #allocation5 [shape = 'u8[2097152]{0}', space=vmem, size = 0x200000, scoped, tag = 'input window, operand 1, single buffered']
    #allocation6 [shape = 's32[1]{0}', space=sflag, size = 0x4, scoped, tag = 'scoped memory for tpu_custom_call.1']
    #allocation7 [shape = 'u8[512]{0}', space=vmem, size = 0x400, scoped, tag = 'input window, operand 2, single buffered']
    #allocation8 [shape = 'u8[512]{0}', space=vmem, size = 0x400, scoped, tag = 'input window, operand 3, single buffered']
    #allocation9 [shape = 's32[1]{0}', space=sflag, size = 0x4, scoped, tag = 'scoped memory for tpu_custom_call.1']
    #allocation10 [shape = 'u8[1024]{0}', space=vmem, size = 0x400, scoped, tag = 'output window, operand 0, single buffered']
    %9 = vsyncpa [#allocation3], 0
    %10 = vsyncpa [#allocation6], 0
    %11 = vsyncpa [#allocation9], 0
    %12 = vsyncpa [#allocation4], 0
    // Predicated region
    $region2: #{tpu_custom_call.1} parent=1 // pred_check
      _
    $region3: #{tpu_custom_call.1} parent=1 // pred_check_branch
      %14 = sbr.rel (0) target = $region5
    $region4: #{tpu_custom_call.1} parent=1 // pred_region
      %s16 = ssub.s32 1024, 1024
      %17 = vsyncadd [#allocation3], %s16
      %s19 = sshll.u32 [#allocation2], 4
      %s20 = int_to_ptr.vmem [resolvable:$true] %s19
      %22 = dma.hbm_to_vmem [thread:$0]  %s0, 1024, %s20, [#allocation3]
    $region5: #{tpu_custom_call.1} parent=1 // pred_fallthru
      _
    // Predicated region
    $region6: #{tpu_custom_call.1} parent=1 // pred_check
      _
    $region7: #{tpu_custom_call.1} parent=1 // pred_check_branch
      %24 = sbr.rel (0) target = $region9
    $region8: #{tpu_custom_call.1} parent=1 // pred_region
      %s26 = ssub.s32 65536, 65536
      %27 = vsyncadd [#allocation6], %s26
      %s28 = sshll.u32 [#allocation5], 4
      %s29 = int_to_ptr.vmem [resolvable:$true] %s28
      %34 = dma.hbm_to_vmem [thread:$0]  %s1, 65536, %s29, [#allocation6], 128, 128, 8
    $region9: #{tpu_custom_call.1} parent=1 // pred_fallthru
      _
    // Predicated region
    $region10: #{tpu_custom_call.1} parent=1 // pred_check
      _
    $region11: #{tpu_custom_call.1} parent=1 // pred_check_branch
      %36 = sbr.rel (0) target = $region13
    $region12: #{tpu_custom_call.1} parent=1 // pred_region
      %s38 = ssub.s32 16, 16
      %39 = vsyncadd [#allocation6], %s38
      %s41 = sshll.u32 [#allocation7], 4
      %s42 = int_to_ptr.vmem [resolvable:$true] %s41
      %44 = dma.hbm_to_vmem [thread:$0]  %s2, 16, %s42, [#allocation6]
    $region13: #{tpu_custom_call.1} parent=1 // pred_fallthru
      _
    // Predicated region
    $region14: #{tpu_custom_call.1} parent=1 // pred_check
      _
    $region15: #{tpu_custom_call.1} parent=1 // pred_check_branch
      %46 = sbr.rel (0) target = $region17
    $region16: #{tpu_custom_call.1} parent=1 // pred_region
      %s48 = ssub.s32 16, 16
      %49 = vsyncadd [#allocation9], %s48
      %s51 = sshll.u32 [#allocation8], 4
      %s52 = int_to_ptr.vmem [resolvable:$true] %s51
      %54 = dma.hbm_to_vmem [thread:$0]  %s3, 16, %s52, [#allocation9]
    $region17: #{tpu_custom_call.1} parent=1 // pred_fallthru
      _
    // Predicated region
    $region18: #{tpu_custom_call.1} parent=1 // pred_check
      _
    $region19: #{tpu_custom_call.1} parent=1 // pred_check_branch
      %56 = sbr.rel (0) target = $region21
    $region20: #{tpu_custom_call.1} parent=1 // pred_region
      %57 = dma.done [#allocation3], 1024
    $region21: #{tpu_custom_call.1} parent=1 // pred_fallthru
      _
    // Predicated region
    $region22: #{tpu_custom_call.1} parent=1 // pred_check
      _
    $region23: #{tpu_custom_call.1} parent=1 // pred_check_branch
      %59 = sbr.rel (0) target = $region25
    $region24: #{tpu_custom_call.1} parent=1 // pred_region
      %60 = dma.done [#allocation6], 65536
    $region25: #{tpu_custom_call.1} parent=1 // pred_fallthru
      _
    // Predicated region
    $region26: #{tpu_custom_call.1} parent=1 // pred_check
      _
    $region27: #{tpu_custom_call.1} parent=1 // pred_check_branch
      %62 = sbr.rel (0) target = $region29
    $region28: #{tpu_custom_call.1} parent=1 // pred_region
      %63 = dma.done [#allocation6], 16
    $region29: #{tpu_custom_call.1} parent=1 // pred_fallthru
      _
    // Predicated region
    $region30: #{tpu_custom_call.1} parent=1 // pred_check
      _
    $region31: #{tpu_custom_call.1} parent=1 // pred_check_branch
      %65 = sbr.rel (0) target = $region33
    $region32: #{tpu_custom_call.1} parent=1 // pred_region
      %66 = dma.done [#allocation9], 16
    $region33: #{tpu_custom_call.1} parent=1 // pred_fallthru
      _
    %v67 = vld [vmem:[#allocation2] sm:$0xff]
    %v68 = vld [vmem:[#allocation2 + $0x8] sm:$0xff]
    %v69 = vld [vmem:[#allocation2 + $0x10] sm:$0xff]
    %v70 = vld [vmem:[#allocation2 + $0x18] sm:$0xff]
    %v71 = vld [vmem:[#allocation2 + $0x20] sm:$0xff]
    %v72 = vld [vmem:[#allocation2 + $0x28] sm:$0xff]
    %v73 = vld [vmem:[#allocation2 + $0x30] sm:$0xff]
    %v74 = vld [vmem:[#allocation2 + $0x38] sm:$0xff]
    %v75 = vld [vmem:[#allocation5] sm:$0xff]
    %v76 = vld [vmem:[#allocation5 + $0x8] sm:$0xff]
    %v77 = vld [vmem:[#allocation5 + $0x10] sm:$0xff]
    %v78 = vld [vmem:[#allocation5 + $0x18] sm:$0xff]
    %v79 = vld [vmem:[#allocation5 + $0x20] sm:$0xff]
    %v80 = vld [vmem:[#allocation5 + $0x28] sm:$0xff]
    %v81 = vld [vmem:[#allocation5 + $0x30] sm:$0xff]
    %v82 = vld [vmem:[#allocation5 + $0x38] sm:$0xff]
    %v83 = vld [vmem:[#allocation5 + $0x40] sm:$0xff]
    %v84 = vld [vmem:[#allocation5 + $0x48] sm:$0xff]
    %v85 = vld [vmem:[#allocation5 + $0x50] sm:$0xff]
    %v86 = vld [vmem:[#allocation5 + $0x58] sm:$0xff]
    %v87 = vld [vmem:[#allocation5 + $0x60] sm:$0xff]
    %v88 = vld [vmem:[#allocation5 + $0x68] sm:$0xff]
    %v89 = vld [vmem:[#allocation5 + $0x70] sm:$0xff]
    %v90 = vld [vmem:[#allocation5 + $0x78] sm:$0xff]
    %v91 = vld [vmem:[#allocation5 + $0x80] sm:$0xff]
    %v92 = vld [vmem:[#allocation5 + $0x88] sm:$0xff]
    %v93 = vld [vmem:[#allocation5 + $0x90] sm:$0xff]
    %v94 = vld [vmem:[#allocation5 + $0x98] sm:$0xff]
    %v95 = vld [vmem:[#allocation5 + $0xa0] sm:$0xff]
    %v96 = vld [vmem:[#allocation5 + $0xa8] sm:$0xff]
    %v97 = vld [vmem:[#allocation5 + $0xb0] sm:$0xff]
    %v98 = vld [vmem:[#allocation5 + $0xb8] sm:$0xff]
    %v99 = vld [vmem:[#allocation5 + $0xc0] sm:$0xff]
    %v100 = vld [vmem:[#allocation5 + $0xc8] sm:$0xff]
    %v101 = vld [vmem:[#allocation5 + $0xd0] sm:$0xff]
    %v102 = vld [vmem:[#allocation5 + $0xd8] sm:$0xff]
    %v103 = vld [vmem:[#allocation5 + $0xe0] sm:$0xff]
    %v104 = vld [vmem:[#allocation5 + $0xe8] sm:$0xff]
    %v105 = vld [vmem:[#allocation5 + $0xf0] sm:$0xff]
    %v106 = vld [vmem:[#allocation5 + $0xf8] sm:$0xff]
    %v107 = vld [vmem:[#allocation5 + $0x100] sm:$0xff]
    %v108 = vld [vmem:[#allocation5 + $0x108] sm:$0xff]
    %v109 = vld [vmem:[#allocation5 + $0x110] sm:$0xff]
    %v110 = vld [vmem:[#allocation5 + $0x118] sm:$0xff]
    %v111 = vld [vmem:[#allocation5 + $0x120] sm:$0xff]
    %v112 = vld [vmem:[#allocation5 + $0x128] sm:$0xff]
    %v113 = vld [vmem:[#allocation5 + $0x130] sm:$0xff]
    %v114 = vld [vmem:[#allocation5 + $0x138] sm:$0xff]
    %v115 = vld [vmem:[#allocation5 + $0x140] sm:$0xff]
    %v116 = vld [vmem:[#allocation5 + $0x148] sm:$0xff]
    %v117 = vld [vmem:[#allocation5 + $0x150] sm:$0xff]
    %v118 = vld [vmem:[#allocation5 + $0x158] sm:$0xff]
    %v119 = vld [vmem:[#allocation5 + $0x160] sm:$0xff]
    %v120 = vld [vmem:[#allocation5 + $0x168] sm:$0xff]
    %v121 = vld [vmem:[#allocation5 + $0x170] sm:$0xff]
    %v122 = vld [vmem:[#allocation5 + $0x178] sm:$0xff]
    %v123 = vld [vmem:[#allocation5 + $0x180] sm:$0xff]
    %v124 = vld [vmem:[#allocation5 + $0x188] sm:$0xff]
    %v125 = vld [vmem:[#allocation5 + $0x190] sm:$0xff]
    %v126 = vld [vmem:[#allocation5 + $0x198] sm:$0xff]
    %v127 = vld [vmem:[#allocation5 + $0x1a0] sm:$0xff]
    %v128 = vld [vmem:[#allocation5 + $0x1a8] sm:$0xff]
    %v129 = vld [vmem:[#allocation5 + $0x1b0] sm:$0xff]
    %v130 = vld [vmem:[#allocation5 + $0x1b8] sm:$0xff]
    %v131 = vld [vmem:[#allocation5 + $0x1c0] sm:$0xff]
    %v132 = vld [vmem:[#allocation5 + $0x1c8] sm:$0xff]
    %v133 = vld [vmem:[#allocation5 + $0x1d0] sm:$0xff]
    %v134 = vld [vmem:[#allocation5 + $0x1d8] sm:$0xff]
    %v135 = vld [vmem:[#allocation5 + $0x1e0] sm:$0xff]
    %v136 = vld [vmem:[#allocation5 + $0x1e8] sm:$0xff]
    %v137 = vld [vmem:[#allocation5 + $0x1f0] sm:$0xff]
    %v138 = vld [vmem:[#allocation5 + $0x1f8] sm:$0xff]
    %v139 = vld [vmem:[#allocation5 + $0x200] sm:$0xff]
    %v140 = vld [vmem:[#allocation5 + $0x208] sm:$0xff]
    %v141 = vld [vmem:[#allocation5 + $0x210] sm:$0xff]
    %v142 = vld [vmem:[#allocation5 + $0x218] sm:$0xff]
    %v143 = vld [vmem:[#allocation5 + $0x220] sm:$0xff]
    %v144 = vld [vmem:[#allocation5 + $0x228] sm:$0xff]
    %v145 = vld [vmem:[#allocation5 + $0x230] sm:$0xff]
    %v146 = vld [vmem:[#allocation5 + $0x238] sm:$0xff]
    %v147 = vld [vmem:[#allocation5 + $0x240] sm:$0xff]
    %v148 = vld [vmem:[#allocation5 + $0x248] sm:$0xff]
    %v149 = vld [vmem:[#allocation5 + $0x250] sm:$0xff]
    %v150 = vld [vmem:[#allocation5 + $0x258] sm:$0xff]
    %v151 = vld [vmem:[#allocation5 + $0x260] sm:$0xff]
    %v152 = vld [vmem:[#allocation5 + $0x268] sm:$0xff]
    %v153 = vld [vmem:[#allocation5 + $0x270] sm:$0xff]
    %v154 = vld [vmem:[#allocation5 + $0x278] sm:$0xff]
    %v155 = vld [vmem:[#allocation5 + $0x280] sm:$0xff]
    %v156 = vld [vmem:[#allocation5 + $0x288] sm:$0xff]
    %v157 = vld [vmem:[#allocation5 + $0x290] sm:$0xff]
    %v158 = vld [vmem:[#allocation5 + $0x298] sm:$0xff]
    %v159 = vld [vmem:[#allocation5 + $0x2a0] sm:$0xff]
    %v160 = vld [vmem:[#allocation5 + $0x2a8] sm:$0xff]
    %v161 = vld [vmem:[#allocation5 + $0x2b0] sm:$0xff]
    %v162 = vld [vmem:[#allocation5 + $0x2b8] sm:$0xff]
    %v163 = vld [vmem:[#allocation5 + $0x2c0] sm:$0xff]
    %v164 = vld [vmem:[#allocation5 + $0x2c8] sm:$0xff]
    %v165 = vld [vmem:[#allocation5 + $0x2d0] sm:$0xff]
    %v166 = vld [vmem:[#allocation5 + $0x2d8] sm:$0xff]
    %v167 = vld [vmem:[#allocation5 + $0x2e0] sm:$0xff]
    %v168 = vld [vmem:[#allocation5 + $0x2e8] sm:$0xff]
    %v169 = vld [vmem:[#allocation5 + $0x2f0] sm:$0xff]
    %v170 = vld [vmem:[#allocation5 + $0x2f8] sm:$0xff]
    %v171 = vld [vmem:[#allocation5 + $0x300] sm:$0xff]
    %v172 = vld [vmem:[#allocation5 + $0x308] sm:$0xff]
    %v173 = vld [vmem:[#allocation5 + $0x310] sm:$0xff]
    %v174 = vld [vmem:[#allocation5 + $0x318] sm:$0xff]
    %v175 = vld [vmem:[#allocation5 + $0x320] sm:$0xff]
    %v176 = vld [vmem:[#allocation5 + $0x328] sm:$0xff]
    %v177 = vld [vmem:[#allocation5 + $0x330] sm:$0xff]
    %v178 = vld [vmem:[#allocation5 + $0x338] sm:$0xff]
    %v179 = vld [vmem:[#allocation5 + $0x340] sm:$0xff]
    %v180 = vld [vmem:[#allocation5 + $0x348] sm:$0xff]
    %v181 = vld [vmem:[#allocation5 + $0x350] sm:$0xff]
    %v182 = vld [vmem:[#allocation5 + $0x358] sm:$0xff]
    %v183 = vld [vmem:[#allocation5 + $0x360] sm:$0xff]
    %v184 = vld [vmem:[#allocation5 + $0x368] sm:$0xff]
    %v185 = vld [vmem:[#allocation5 + $0x370] sm:$0xff]
    %v186 = vld [vmem:[#allocation5 + $0x378] sm:$0xff]
    %v187 = vld [vmem:[#allocation5 + $0x380] sm:$0xff]
    %v188 = vld [vmem:[#allocation5 + $0x388] sm:$0xff]
    %v189 = vld [vmem:[#allocation5 + $0x390] sm:$0xff]
    %v190 = vld [vmem:[#allocation5 + $0x398] sm:$0xff]
    %v191 = vld [vmem:[#allocation5 + $0x3a0] sm:$0xff]
    %v192 = vld [vmem:[#allocation5 + $0x3a8] sm:$0xff]
    %v193 = vld [vmem:[#allocation5 + $0x3b0] sm:$0xff]
    %v194 = vld [vmem:[#allocation5 + $0x3b8] sm:$0xff]
    %v195 = vld [vmem:[#allocation5 + $0x3c0] sm:$0xff]
    %v196 = vld [vmem:[#allocation5 + $0x3c8] sm:$0xff]
    %v197 = vld [vmem:[#allocation5 + $0x3d0] sm:$0xff]
    %v198 = vld [vmem:[#allocation5 + $0x3d8] sm:$0xff]
    %v199 = vld [vmem:[#allocation5 + $0x3e0] sm:$0xff]
    %v200 = vld [vmem:[#allocation5 + $0x3e8] sm:$0xff]
    %v201 = vld [vmem:[#allocation5 + $0x3f0] sm:$0xff]
    %v202 = vld [vmem:[#allocation5 + $0x3f8] sm:$0xff]
    %v203 = vld [vmem:[#allocation5 + $0x400] sm:$0xff]
    %v204 = vld [vmem:[#allocation5 + $0x408] sm:$0xff]
    %v205 = vld [vmem:[#allocation5 + $0x410] sm:$0xff]
    %v206 = vld [vmem:[#allocation5 + $0x418] sm:$0xff]
    %v207 = vld [vmem:[#allocation5 + $0x420] sm:$0xff]
    %v208 = vld [vmem:[#allocation5 + $0x428] sm:$0xff]
    %v209 = vld [vmem:[#allocation5 + $0x430] sm:$0xff]
    %v210 = vld [vmem:[#allocation5 + $0x438] sm:$0xff]
    %v211 = vld [vmem:[#allocation5 + $0x440] sm:$0xff]
    %v212 = vld [vmem:[#allocation5 + $0x448] sm:$0xff]
    %v213 = vld [vmem:[#allocation5 + $0x450] sm:$0xff]
    %v214 = vld [vmem:[#allocation5 + $0x458] sm:$0xff]
    %v215 = vld [vmem:[#allocation5 + $0x460] sm:$0xff]
    %v216 = vld [vmem:[#allocation5 + $0x468] sm:$0xff]
    %v217 = vld [vmem:[#allocation5 + $0x470] sm:$0xff]
    %v218 = vld [vmem:[#allocation5 + $0x478] sm:$0xff]
    %v219 = vld [vmem:[#allocation5 + $0x480] sm:$0xff]
    %v220 = vld [vmem:[#allocation5 + $0x488] sm:$0xff]
    %v221 = vld [vmem:[#allocation5 + $0x490] sm:$0xff]
    %v222 = vld [vmem:[#allocation5 + $0x498] sm:$0xff]
    %v223 = vld [vmem:[#allocation5 + $0x4a0] sm:$0xff]
    %v224 = vld [vmem:[#allocation5 + $0x4a8] sm:$0xff]
    %v225 = vld [vmem:[#allocation5 + $0x4b0] sm:$0xff]
    %v226 = vld [vmem:[#allocation5 + $0x4b8] sm:$0xff]
    %v227 = vld [vmem:[#allocation5 + $0x4c0] sm:$0xff]
    %v228 = vld [vmem:[#allocation5 + $0x4c8] sm:$0xff]
    %v229 = vld [vmem:[#allocation5 + $0x4d0] sm:$0xff]
    %v230 = vld [vmem:[#allocation5 + $0x4d8] sm:$0xff]
    %v231 = vld [vmem:[#allocation5 + $0x4e0] sm:$0xff]
    %v232 = vld [vmem:[#allocation5 + $0x4e8] sm:$0xff]
    %v233 = vld [vmem:[#allocation5 + $0x4f0] sm:$0xff]
    %v234 = vld [vmem:[#allocation5 + $0x4f8] sm:$0xff]
    %v235 = vld [vmem:[#allocation5 + $0x500] sm:$0xff]
    %v236 = vld [vmem:[#allocation5 + $0x508] sm:$0xff]
    %v237 = vld [vmem:[#allocation5 + $0x510] sm:$0xff]
    %v238 = vld [vmem:[#allocation5 + $0x518] sm:$0xff]
    %v239 = vld [vmem:[#allocation5 + $0x520] sm:$0xff]
    %v240 = vld [vmem:[#allocation5 + $0x528] sm:$0xff]
    %v241 = vld [vmem:[#allocation5 + $0x530] sm:$0xff]
    %v242 = vld [vmem:[#allocation5 + $0x538] sm:$0xff]
    %v243 = vld [vmem:[#allocation5 + $0x540] sm:$0xff]
    %v244 = vld [vmem:[#allocation5 + $0x548] sm:$0xff]
    %v245 = vld [vmem:[#allocation5 + $0x550] sm:$0xff]
    %v246 = vld [vmem:[#allocation5 + $0x558] sm:$0xff]
    %v247 = vld [vmem:[#allocation5 + $0x560] sm:$0xff]
    %v248 = vld [vmem:[#allocation5 + $0x568] sm:$0xff]
    %v249 = vld [vmem:[#allocation5 + $0x570] sm:$0xff]
    %v250 = vld [vmem:[#allocation5 + $0x578] sm:$0xff]
    %v251 = vld [vmem:[#allocation5 + $0x580] sm:$0xff]
    %v252 = vld [vmem:[#allocation5 + $0x588] sm:$0xff]
    %v253 = vld [vmem:[#allocation5 + $0x590] sm:$0xff]
    %v254 = vld [vmem:[#allocation5 + $0x598] sm:$0xff]
    %v255 = vld [vmem:[#allocation5 + $0x5a0] sm:$0xff]
    %v256 = vld [vmem:[#allocation5 + $0x5a8] sm:$0xff]
    %v257 = vld [vmem:[#allocation5 + $0x5b0] sm:$0xff]
    %v258 = vld [vmem:[#allocation5 + $0x5b8] sm:$0xff]
    %v259 = vld [vmem:[#allocation5 + $0x5c0] sm:$0xff]
    %v260 = vld [vmem:[#allocation5 + $0x5c8] sm:$0xff]
    %v261 = vld [vmem:[#allocation5 + $0x5d0] sm:$0xff]
    %v262 = vld [vmem:[#allocation5 + $0x5d8] sm:$0xff]
    %v263 = vld [vmem:[#allocation5 + $0x5e0] sm:$0xff]
    %v264 = vld [vmem:[#allocation5 + $0x5e8] sm:$0xff]
    %v265 = vld [vmem:[#allocation5 + $0x5f0] sm:$0xff]
    %v266 = vld [vmem:[#allocation5 + $0x5f8] sm:$0xff]
    %v267 = vld [vmem:[#allocation5 + $0x600] sm:$0xff]
    %v268 = vld [vmem:[#allocation5 + $0x608] sm:$0xff]
    %v269 = vld [vmem:[#allocation5 + $0x610] sm:$0xff]
    %v270 = vld [vmem:[#allocation5 + $0x618] sm:$0xff]
    %v271 = vld [vmem:[#allocation5 + $0x620] sm:$0xff]
    %v272 = vld [vmem:[#allocation5 + $0x628] sm:$0xff]
    %v273 = vld [vmem:[#allocation5 + $0x630] sm:$0xff]
    %v274 = vld [vmem:[#allocation5 + $0x638] sm:$0xff]
    %v275 = vld [vmem:[#allocation5 + $0x640] sm:$0xff]
    %v276 = vld [vmem:[#allocation5 + $0x648] sm:$0xff]
    %v277 = vld [vmem:[#allocation5 + $0x650] sm:$0xff]
    %v278 = vld [vmem:[#allocation5 + $0x658] sm:$0xff]
    %v279 = vld [vmem:[#allocation5 + $0x660] sm:$0xff]
    %v280 = vld [vmem:[#allocation5 + $0x668] sm:$0xff]
    %v281 = vld [vmem:[#allocation5 + $0x670] sm:$0xff]
    %v282 = vld [vmem:[#allocation5 + $0x678] sm:$0xff]
    %v283 = vld [vmem:[#allocation5 + $0x680] sm:$0xff]
    %v284 = vld [vmem:[#allocation5 + $0x688] sm:$0xff]
    %v285 = vld [vmem:[#allocation5 + $0x690] sm:$0xff]
    %v286 = vld [vmem:[#allocation5 + $0x698] sm:$0xff]
    %v287 = vld [vmem:[#allocation5 + $0x6a0] sm:$0xff]
    %v288 = vld [vmem:[#allocation5 + $0x6a8] sm:$0xff]
    %v289 = vld [vmem:[#allocation5 + $0x6b0] sm:$0xff]
    %v290 = vld [vmem:[#allocation5 + $0x6b8] sm:$0xff]
    %v291 = vld [vmem:[#allocation5 + $0x6c0] sm:$0xff]
    %v292 = vld [vmem:[#allocation5 + $0x6c8] sm:$0xff]
    %v293 = vld [vmem:[#allocation5 + $0x6d0] sm:$0xff]
    %v294 = vld [vmem:[#allocation5 + $0x6d8] sm:$0xff]
    %v295 = vld [vmem:[#allocation5 + $0x6e0] sm:$0xff]
    %v296 = vld [vmem:[#allocation5 + $0x6e8] sm:$0xff]
    %v297 = vld [vmem:[#allocation5 + $0x6f0] sm:$0xff]
    %v298 = vld [vmem:[#allocation5 + $0x6f8] sm:$0xff]
    %v299 = vld [vmem:[#allocation5 + $0x700] sm:$0xff]
    %v300 = vld [vmem:[#allocation5 + $0x708] sm:$0xff]
    %v301 = vld [vmem:[#allocation5 + $0x710] sm:$0xff]
    %v302 = vld [vmem:[#allocation5 + $0x718] sm:$0xff]
    %v303 = vld [vmem:[#allocation5 + $0x720] sm:$0xff]
    %v304 = vld [vmem:[#allocation5 + $0x728] sm:$0xff]
    %v305 = vld [vmem:[#allocation5 + $0x730] sm:$0xff]
    %v306 = vld [vmem:[#allocation5 + $0x738] sm:$0xff]
    %v307 = vld [vmem:[#allocation5 + $0x740] sm:$0xff]
    %v308 = vld [vmem:[#allocation5 + $0x748] sm:$0xff]
    %v309 = vld [vmem:[#allocation5 + $0x750] sm:$0xff]
    %v310 = vld [vmem:[#allocation5 + $0x758] sm:$0xff]
    %v311 = vld [vmem:[#allocation5 + $0x760] sm:$0xff]
    %v312 = vld [vmem:[#allocation5 + $0x768] sm:$0xff]
    %v313 = vld [vmem:[#allocation5 + $0x770] sm:$0xff]
    %v314 = vld [vmem:[#allocation5 + $0x778] sm:$0xff]
    %v315 = vld [vmem:[#allocation5 + $0x780] sm:$0xff]
    %v316 = vld [vmem:[#allocation5 + $0x788] sm:$0xff]
    %v317 = vld [vmem:[#allocation5 + $0x790] sm:$0xff]
    %v318 = vld [vmem:[#allocation5 + $0x798] sm:$0xff]
    %v319 = vld [vmem:[#allocation5 + $0x7a0] sm:$0xff]
    %v320 = vld [vmem:[#allocation5 + $0x7a8] sm:$0xff]
    %v321 = vld [vmem:[#allocation5 + $0x7b0] sm:$0xff]
    %v322 = vld [vmem:[#allocation5 + $0x7b8] sm:$0xff]
    %v323 = vld [vmem:[#allocation5 + $0x7c0] sm:$0xff]
    %v324 = vld [vmem:[#allocation5 + $0x7c8] sm:$0xff]
    %v325 = vld [vmem:[#allocation5 + $0x7d0] sm:$0xff]
    %v326 = vld [vmem:[#allocation5 + $0x7d8] sm:$0xff]
    %v327 = vld [vmem:[#allocation5 + $0x7e0] sm:$0xff]
    %v328 = vld [vmem:[#allocation5 + $0x7e8] sm:$0xff]
    %v329 = vld [vmem:[#allocation5 + $0x7f0] sm:$0xff]
    %v330 = vld [vmem:[#allocation5 + $0x7f8] sm:$0xff]
    %v331 = vld [vmem:[#allocation5 + $0x800] sm:$0xff]
    %v332 = vld [vmem:[#allocation5 + $0x808] sm:$0xff]
    %v333 = vld [vmem:[#allocation5 + $0x810] sm:$0xff]
    %v334 = vld [vmem:[#allocation5 + $0x818] sm:$0xff]
    %v335 = vld [vmem:[#allocation5 + $0x820] sm:$0xff]
    %v336 = vld [vmem:[#allocation5 + $0x828] sm:$0xff]
    %v337 = vld [vmem:[#allocation5 + $0x830] sm:$0xff]
    %v338 = vld [vmem:[#allocation5 + $0x838] sm:$0xff]
    %v339 = vld [vmem:[#allocation5 + $0x840] sm:$0xff]
    %v340 = vld [vmem:[#allocation5 + $0x848] sm:$0xff]
    %v341 = vld [vmem:[#allocation5 + $0x850] sm:$0xff]
    %v342 = vld [vmem:[#allocation5 + $0x858] sm:$0xff]
    %v343 = vld [vmem:[#allocation5 + $0x860] sm:$0xff]
    %v344 = vld [vmem:[#allocation5 + $0x868] sm:$0xff]
    %v345 = vld [vmem:[#allocation5 + $0x870] sm:$0xff]
    %v346 = vld [vmem:[#allocation5 + $0x878] sm:$0xff]
    %v347 = vld [vmem:[#allocation5 + $0x880] sm:$0xff]
    %v348 = vld [vmem:[#allocation5 + $0x888] sm:$0xff]
    %v349 = vld [vmem:[#allocation5 + $0x890] sm:$0xff]
    %v350 = vld [vmem:[#allocation5 + $0x898] sm:$0xff]
    %v351 = vld [vmem:[#allocation5 + $0x8a0] sm:$0xff]
    %v352 = vld [vmem:[#allocation5 + $0x8a8] sm:$0xff]
    %v353 = vld [vmem:[#allocation5 + $0x8b0] sm:$0xff]
    %v354 = vld [vmem:[#allocation5 + $0x8b8] sm:$0xff]
    %v355 = vld [vmem:[#allocation5 + $0x8c0] sm:$0xff]
    %v356 = vld [vmem:[#allocation5 + $0x8c8] sm:$0xff]
    %v357 = vld [vmem:[#allocation5 + $0x8d0] sm:$0xff]
    %v358 = vld [vmem:[#allocation5 + $0x8d8] sm:$0xff]
    %v359 = vld [vmem:[#allocation5 + $0x8e0] sm:$0xff]
    %v360 = vld [vmem:[#allocation5 + $0x8e8] sm:$0xff]
    %v361 = vld [vmem:[#allocation5 + $0x8f0] sm:$0xff]
    %v362 = vld [vmem:[#allocation5 + $0x8f8] sm:$0xff]
    %v363 = vld [vmem:[#allocation5 + $0x900] sm:$0xff]
    %v364 = vld [vmem:[#allocation5 + $0x908] sm:$0xff]
    %v365 = vld [vmem:[#allocation5 + $0x910] sm:$0xff]
    %v366 = vld [vmem:[#allocation5 + $0x918] sm:$0xff]
    %v367 = vld [vmem:[#allocation5 + $0x920] sm:$0xff]
    %v368 = vld [vmem:[#allocation5 + $0x928] sm:$0xff]
    %v369 = vld [vmem:[#allocation5 + $0x930] sm:$0xff]
    %v370 = vld [vmem:[#allocation5 + $0x938] sm:$0xff]
    %v371 = vld [vmem:[#allocation5 + $0x940] sm:$0xff]
    %v372 = vld [vmem:[#allocation5 + $0x948] sm:$0xff]
    %v373 = vld [vmem:[#allocation5 + $0x950] sm:$0xff]
    %v374 = vld [vmem:[#allocation5 + $0x958] sm:$0xff]
    %v375 = vld [vmem:[#allocation5 + $0x960] sm:$0xff]
    %v376 = vld [vmem:[#allocation5 + $0x968] sm:$0xff]
    %v377 = vld [vmem:[#allocation5 + $0x970] sm:$0xff]
    %v378 = vld [vmem:[#allocation5 + $0x978] sm:$0xff]
    %v379 = vld [vmem:[#allocation5 + $0x980] sm:$0xff]
    %v380 = vld [vmem:[#allocation5 + $0x988] sm:$0xff]
    %v381 = vld [vmem:[#allocation5 + $0x990] sm:$0xff]
    %v382 = vld [vmem:[#allocation5 + $0x998] sm:$0xff]
    %v383 = vld [vmem:[#allocation5 + $0x9a0] sm:$0xff]
    %v384 = vld [vmem:[#allocation5 + $0x9a8] sm:$0xff]
    %v385 = vld [vmem:[#allocation5 + $0x9b0] sm:$0xff]
    %v386 = vld [vmem:[#allocation5 + $0x9b8] sm:$0xff]
    %v387 = vld [vmem:[#allocation5 + $0x9c0] sm:$0xff]
    %v388 = vld [vmem:[#allocation5 + $0x9c8] sm:$0xff]
    %v389 = vld [vmem:[#allocation5 + $0x9d0] sm:$0xff]
    %v390 = vld [vmem:[#allocation5 + $0x9d8] sm:$0xff]
    %v391 = vld [vmem:[#allocation5 + $0x9e0] sm:$0xff]
    %v392 = vld [vmem:[#allocation5 + $0x9e8] sm:$0xff]
    %v393 = vld [vmem:[#allocation5 + $0x9f0] sm:$0xff]
    %v394 = vld [vmem:[#allocation5 + $0x9f8] sm:$0xff]
    %v395 = vld [vmem:[#allocation5 + $0xa00] sm:$0xff]
    %v396 = vld [vmem:[#allocation5 + $0xa08] sm:$0xff]
    %v397 = vld [vmem:[#allocation5 + $0xa10] sm:$0xff]
    %v398 = vld [vmem:[#allocation5 + $0xa18] sm:$0xff]
    %v399 = vld [vmem:[#allocation5 + $0xa20] sm:$0xff]
    %v400 = vld [vmem:[#allocation5 + $0xa28] sm:$0xff]
    %v401 = vld [vmem:[#allocation5 + $0xa30] sm:$0xff]
    %v402 = vld [vmem:[#allocation5 + $0xa38] sm:$0xff]
    %v403 = vld [vmem:[#allocation5 + $0xa40] sm:$0xff]
    %v404 = vld [vmem:[#allocation5 + $0xa48] sm:$0xff]
    %v405 = vld [vmem:[#allocation5 + $0xa50] sm:$0xff]
    %v406 = vld [vmem:[#allocation5 + $0xa58] sm:$0xff]
    %v407 = vld [vmem:[#allocation5 + $0xa60] sm:$0xff]
    %v408 = vld [vmem:[#allocation5 + $0xa68] sm:$0xff]
    %v409 = vld [vmem:[#allocation5 + $0xa70] sm:$0xff]
    %v410 = vld [vmem:[#allocation5 + $0xa78] sm:$0xff]
    %v411 = vld [vmem:[#allocation5 + $0xa80] sm:$0xff]
    %v412 = vld [vmem:[#allocation5 + $0xa88] sm:$0xff]
    %v413 = vld [vmem:[#allocation5 + $0xa90] sm:$0xff]
    %v414 = vld [vmem:[#allocation5 + $0xa98] sm:$0xff]
    %v415 = vld [vmem:[#allocation5 + $0xaa0] sm:$0xff]
    %v416 = vld [vmem:[#allocation5 + $0xaa8] sm:$0xff]
    %v417 = vld [vmem:[#allocation5 + $0xab0] sm:$0xff]
    %v418 = vld [vmem:[#allocation5 + $0xab8] sm:$0xff]
    %v419 = vld [vmem:[#allocation5 + $0xac0] sm:$0xff]
    %v420 = vld [vmem:[#allocation5 + $0xac8] sm:$0xff]
    %v421 = vld [vmem:[#allocation5 + $0xad0] sm:$0xff]
    %v422 = vld [vmem:[#allocation5 + $0xad8] sm:$0xff]
    %v423 = vld [vmem:[#allocation5 + $0xae0] sm:$0xff]
    %v424 = vld [vmem:[#allocation5 + $0xae8] sm:$0xff]
    %v425 = vld [vmem:[#allocation5 + $0xaf0] sm:$0xff]
    %v426 = vld [vmem:[#allocation5 + $0xaf8] sm:$0xff]
    %v427 = vld [vmem:[#allocation5 + $0xb00] sm:$0xff]
    %v428 = vld [vmem:[#allocation5 + $0xb08] sm:$0xff]
    %v429 = vld [vmem:[#allocation5 + $0xb10] sm:$0xff]
    %v430 = vld [vmem:[#allocation5 + $0xb18] sm:$0xff]
    %v431 = vld [vmem:[#allocation5 + $0xb20] sm:$0xff]
    %v432 = vld [vmem:[#allocation5 + $0xb28] sm:$0xff]
    %v433 = vld [vmem:[#allocation5 + $0xb30] sm:$0xff]
    %v434 = vld [vmem:[#allocation5 + $0xb38] sm:$0xff]
    %v435 = vld [vmem:[#allocation5 + $0xb40] sm:$0xff]
    %v436 = vld [vmem:[#allocation5 + $0xb48] sm:$0xff]
    %v437 = vld [vmem:[#allocation5 + $0xb50] sm:$0xff]
    %v438 = vld [vmem:[#allocation5 + $0xb58] sm:$0xff]
    %v439 = vld [vmem:[#allocation5 + $0xb60] sm:$0xff]
    %v440 = vld [vmem:[#allocation5 + $0xb68] sm:$0xff]
    %v441 = vld [vmem:[#allocation5 + $0xb70] sm:$0xff]
    %v442 = vld [vmem:[#allocation5 + $0xb78] sm:$0xff]
    %v443 = vld [vmem:[#allocation5 + $0xb80] sm:$0xff]
    %v444 = vld [vmem:[#allocation5 + $0xb88] sm:$0xff]
    %v445 = vld [vmem:[#allocation5 + $0xb90] sm:$0xff]
    %v446 = vld [vmem:[#allocation5 + $0xb98] sm:$0xff]
    %v447 = vld [vmem:[#allocation5 + $0xba0] sm:$0xff]
    %v448 = vld [vmem:[#allocation5 + $0xba8] sm:$0xff]
    %v449 = vld [vmem:[#allocation5 + $0xbb0] sm:$0xff]
    %v450 = vld [vmem:[#allocation5 + $0xbb8] sm:$0xff]
    %v451 = vld [vmem:[#allocation5 + $0xbc0] sm:$0xff]
    %v452 = vld [vmem:[#allocation5 + $0xbc8] sm:$0xff]
    %v453 = vld [vmem:[#allocation5 + $0xbd0] sm:$0xff]
    %v454 = vld [vmem:[#allocation5 + $0xbd8] sm:$0xff]
    %v455 = vld [vmem:[#allocation5 + $0xbe0] sm:$0xff]
    %v456 = vld [vmem:[#allocation5 + $0xbe8] sm:$0xff]
    %v457 = vld [vmem:[#allocation5 + $0xbf0] sm:$0xff]
    %v458 = vld [vmem:[#allocation5 + $0xbf8] sm:$0xff]
    %v459 = vld [vmem:[#allocation5 + $0xc00] sm:$0xff]
    %v460 = vld [vmem:[#allocation5 + $0xc08] sm:$0xff]
    %v461 = vld [vmem:[#allocation5 + $0xc10] sm:$0xff]
    %v462 = vld [vmem:[#allocation5 + $0xc18] sm:$0xff]
    %v463 = vld [vmem:[#allocation5 + $0xc20] sm:$0xff]
    %v464 = vld [vmem:[#allocation5 + $0xc28] sm:$0xff]
    %v465 = vld [vmem:[#allocation5 + $0xc30] sm:$0xff]
    %v466 = vld [vmem:[#allocation5 + $0xc38] sm:$0xff]
    %v467 = vld [vmem:[#allocation5 + $0xc40] sm:$0xff]
    %v468 = vld [vmem:[#allocation5 + $0xc48] sm:$0xff]
    %v469 = vld [vmem:[#allocation5 + $0xc50] sm:$0xff]
    %v470 = vld [vmem:[#allocation5 + $0xc58] sm:$0xff]
    %v471 = vld [vmem:[#allocation5 + $0xc60] sm:$0xff]
    %v472 = vld [vmem:[#allocation5 + $0xc68] sm:$0xff]
    %v473 = vld [vmem:[#allocation5 + $0xc70] sm:$0xff]
    %v474 = vld [vmem:[#allocation5 + $0xc78] sm:$0xff]
    %v475 = vld [vmem:[#allocation5 + $0xc80] sm:$0xff]
    %v476 = vld [vmem:[#allocation5 + $0xc88] sm:$0xff]
    %v477 = vld [vmem:[#allocation5 + $0xc90] sm:$0xff]
    %v478 = vld [vmem:[#allocation5 + $0xc98] sm:$0xff]
    %v479 = vld [vmem:[#allocation5 + $0xca0] sm:$0xff]
    %v480 = vld [vmem:[#allocation5 + $0xca8] sm:$0xff]
    %v481 = vld [vmem:[#allocation5 + $0xcb0] sm:$0xff]
    %v482 = vld [vmem:[#allocation5 + $0xcb8] sm:$0xff]
    %v483 = vld [vmem:[#allocation5 + $0xcc0] sm:$0xff]
    %v484 = vld [vmem:[#allocation5 + $0xcc8] sm:$0xff]
    %v485 = vld [vmem:[#allocation5 + $0xcd0] sm:$0xff]
    %v486 = vld [vmem:[#allocation5 + $0xcd8] sm:$0xff]
    %v487 = vld [vmem:[#allocation5 + $0xce0] sm:$0xff]
    %v488 = vld [vmem:[#allocation5 + $0xce8] sm:$0xff]
    %v489 = vld [vmem:[#allocation5 + $0xcf0] sm:$0xff]
    %v490 = vld [vmem:[#allocation5 + $0xcf8] sm:$0xff]
    %v491 = vld [vmem:[#allocation5 + $0xd00] sm:$0xff]
    %v492 = vld [vmem:[#allocation5 + $0xd08] sm:$0xff]
    %v493 = vld [vmem:[#allocation5 + $0xd10] sm:$0xff]
    %v494 = vld [vmem:[#allocation5 + $0xd18] sm:$0xff]
    %v495 = vld [vmem:[#allocation5 + $0xd20] sm:$0xff]
    %v496 = vld [vmem:[#allocation5 + $0xd28] sm:$0xff]
    %v497 = vld [vmem:[#allocation5 + $0xd30] sm:$0xff]
    %v498 = vld [vmem:[#allocation5 + $0xd38] sm:$0xff]
    %v499 = vld [vmem:[#allocation5 + $0xd40] sm:$0xff]
    %v500 = vld [vmem:[#allocation5 + $0xd48] sm:$0xff]
    %v501 = vld [vmem:[#allocation5 + $0xd50] sm:$0xff]
    %v502 = vld [vmem:[#allocation5 + $0xd58] sm:$0xff]
    %v503 = vld [vmem:[#allocation5 + $0xd60] sm:$0xff]
    %v504 = vld [vmem:[#allocation5 + $0xd68] sm:$0xff]
    %v505 = vld [vmem:[#allocation5 + $0xd70] sm:$0xff]
    %v506 = vld [vmem:[#allocation5 + $0xd78] sm:$0xff]
    %v507 = vld [vmem:[#allocation5 + $0xd80] sm:$0xff]
    %v508 = vld [vmem:[#allocation5 + $0xd88] sm:$0xff]
    %v509 = vld [vmem:[#allocation5 + $0xd90] sm:$0xff]
    %v510 = vld [vmem:[#allocation5 + $0xd98] sm:$0xff]
    %v511 = vld [vmem:[#allocation5 + $0xda0] sm:$0xff]
    %v512 = vld [vmem:[#allocation5 + $0xda8] sm:$0xff]
    %v513 = vld [vmem:[#allocation5 + $0xdb0] sm:$0xff]
    %v514 = vld [vmem:[#allocation5 + $0xdb8] sm:$0xff]
    %v515 = vld [vmem:[#allocation5 + $0xdc0] sm:$0xff]
    %v516 = vld [vmem:[#allocation5 + $0xdc8] sm:$0xff]
    %v517 = vld [vmem:[#allocation5 + $0xdd0] sm:$0xff]
    %v518 = vld [vmem:[#allocation5 + $0xdd8] sm:$0xff]
    %v519 = vld [vmem:[#allocation5 + $0xde0] sm:$0xff]
    %v520 = vld [vmem:[#allocation5 + $0xde8] sm:$0xff]
    %v521 = vld [vmem:[#allocation5 + $0xdf0] sm:$0xff]
    %v522 = vld [vmem:[#allocation5 + $0xdf8] sm:$0xff]
    %v523 = vld [vmem:[#allocation5 + $0xe00] sm:$0xff]
    %v524 = vld [vmem:[#allocation5 + $0xe08] sm:$0xff]
    %v525 = vld [vmem:[#allocation5 + $0xe10] sm:$0xff]
    %v526 = vld [vmem:[#allocation5 + $0xe18] sm:$0xff]
    %v527 = vld [vmem:[#allocation5 + $0xe20] sm:$0xff]
    %v528 = vld [vmem:[#allocation5 + $0xe28] sm:$0xff]
    %v529 = vld [vmem:[#allocation5 + $0xe30] sm:$0xff]
    %v530 = vld [vmem:[#allocation5 + $0xe38] sm:$0xff]
    %v531 = vld [vmem:[#allocation5 + $0xe40] sm:$0xff]
    %v532 = vld [vmem:[#allocation5 + $0xe48] sm:$0xff]
    %v533 = vld [vmem:[#allocation5 + $0xe50] sm:$0xff]
    %v534 = vld [vmem:[#allocation5 + $0xe58] sm:$0xff]
    %v535 = vld [vmem:[#allocation5 + $0xe60] sm:$0xff]
    %v536 = vld [vmem:[#allocation5 + $0xe68] sm:$0xff]
    %v537 = vld [vmem:[#allocation5 + $0xe70] sm:$0xff]
    %v538 = vld [vmem:[#allocation5 + $0xe78] sm:$0xff]
    %v539 = vld [vmem:[#allocation5 + $0xe80] sm:$0xff]
    %v540 = vld [vmem:[#allocation5 + $0xe88] sm:$0xff]
    %v541 = vld [vmem:[#allocation5 + $0xe90] sm:$0xff]
    %v542 = vld [vmem:[#allocation5 + $0xe98] sm:$0xff]
    %v543 = vld [vmem:[#allocation5 + $0xea0] sm:$0xff]
    %v544 = vld [vmem:[#allocation5 + $0xea8] sm:$0xff]
    %v545 = vld [vmem:[#allocation5 + $0xeb0] sm:$0xff]
    %v546 = vld [vmem:[#allocation5 + $0xeb8] sm:$0xff]
    %v547 = vld [vmem:[#allocation5 + $0xec0] sm:$0xff]
    %v548 = vld [vmem:[#allocation5 + $0xec8] sm:$0xff]
    %v549 = vld [vmem:[#allocation5 + $0xed0] sm:$0xff]
    %v550 = vld [vmem:[#allocation5 + $0xed8] sm:$0xff]
    %v551 = vld [vmem:[#allocation5 + $0xee0] sm:$0xff]
    %v552 = vld [vmem:[#allocation5 + $0xee8] sm:$0xff]
    %v553 = vld [vmem:[#allocation5 + $0xef0] sm:$0xff]
    %v554 = vld [vmem:[#allocation5 + $0xef8] sm:$0xff]
    %v555 = vld [vmem:[#allocation5 + $0xf00] sm:$0xff]
    %v556 = vld [vmem:[#allocation5 + $0xf08] sm:$0xff]
    %v557 = vld [vmem:[#allocation5 + $0xf10] sm:$0xff]
    %v558 = vld [vmem:[#allocation5 + $0xf18] sm:$0xff]
    %v559 = vld [vmem:[#allocation5 + $0xf20] sm:$0xff]
    %v560 = vld [vmem:[#allocation5 + $0xf28] sm:$0xff]
    %v561 = vld [vmem:[#allocation5 + $0xf30] sm:$0xff]
    %v562 = vld [vmem:[#allocation5 + $0xf38] sm:$0xff]
    %v563 = vld [vmem:[#allocation5 + $0xf40] sm:$0xff]
    %v564 = vld [vmem:[#allocation5 + $0xf48] sm:$0xff]
    %v565 = vld [vmem:[#allocation5 + $0xf50] sm:$0xff]
    %v566 = vld [vmem:[#allocation5 + $0xf58] sm:$0xff]
    %v567 = vld [vmem:[#allocation5 + $0xf60] sm:$0xff]
    %v568 = vld [vmem:[#allocation5 + $0xf68] sm:$0xff]
    %v569 = vld [vmem:[#allocation5 + $0xf70] sm:$0xff]
    %v570 = vld [vmem:[#allocation5 + $0xf78] sm:$0xff]
    %v571 = vld [vmem:[#allocation5 + $0xf80] sm:$0xff]
    %v572 = vld [vmem:[#allocation5 + $0xf88] sm:$0xff]
    %v573 = vld [vmem:[#allocation5 + $0xf90] sm:$0xff]
    %v574 = vld [vmem:[#allocation5 + $0xf98] sm:$0xff]
    %v575 = vld [vmem:[#allocation5 + $0xfa0] sm:$0xff]
    %v576 = vld [vmem:[#allocation5 + $0xfa8] sm:$0xff]
    %v577 = vld [vmem:[#allocation5 + $0xfb0] sm:$0xff]
    %v578 = vld [vmem:[#allocation5 + $0xfb8] sm:$0xff]
    %v579 = vld [vmem:[#allocation5 + $0xfc0] sm:$0xff]
    %v580 = vld [vmem:[#allocation5 + $0xfc8] sm:$0xff]
    %v581 = vld [vmem:[#allocation5 + $0xfd0] sm:$0xff]
    %v582 = vld [vmem:[#allocation5 + $0xfd8] sm:$0xff]
    %v583 = vld [vmem:[#allocation5 + $0xfe0] sm:$0xff]
    %v584 = vld [vmem:[#allocation5 + $0xfe8] sm:$0xff]
    %v585 = vld [vmem:[#allocation5 + $0xff0] sm:$0xff]
    %v586 = vld [vmem:[#allocation5 + $0xff8] sm:$0xff]
    %v587 = vmax.f32 %v67, 0.0
    %v588 = vmax.f32 %v68, 0.0
    %v589 = vmax.f32 %v69, 0.0
    %v590 = vmax.f32 %v70, 0.0
    %v591 = vmax.f32 %v71, 0.0
    %v592 = vmax.f32 %v72, 0.0
    %v593 = vmax.f32 %v73, 0.0
    %v594 = vmax.f32 %v74, 0.0
    %v603 = vcombine.high %v587, %v587
    %v605 = vunpack.c.l.s4 1983009808
    %v606 = vunpack.c.0.s8 %v605
    %v607 = vlaneseq
    %v608 = vshrl.u32 %v607, 7
    %v609 = vsub.s32 %v606, %v608
    %v610 = vrot.slane %v587, %v609
    %v612 = vunpack.c.l.s4 1983009808
    %v613 = vunpack.c.0.s8 %v612
    %v614 = vlaneseq
    %v615 = vshrl.u32 %v614, 7
    %v616 = vsub.s32 %v613, %v615
    %v617 = vrot.slane %v603, %v616
    %v618 = vcombine.high %v610, %v610
    %v619 = vcombine.high %v617, %v617
    %v620 = vcombine.high %v588, %v588
    %v622 = vunpack.c.l.s4 1983009808
    %v623 = vunpack.c.0.s8 %v622
    %v624 = vlaneseq
    %v625 = vshrl.u32 %v624, 7
    %v626 = vsub.s32 %v623, %v625
    %v627 = vrot.slane %v588, %v626
    %v629 = vunpack.c.l.s4 1983009808
    %v630 = vunpack.c.0.s8 %v629
    %v631 = vlaneseq
    %v632 = vshrl.u32 %v631, 7
    %v633 = vsub.s32 %v630, %v632
    %v634 = vrot.slane %v620, %v633
    %v635 = vcombine.high %v627, %v627
    %v636 = vcombine.high %v634, %v634
    %v637 = vcombine.high %v589, %v589
    %v639 = vunpack.c.l.s4 1983009808
    %v640 = vunpack.c.0.s8 %v639
    %v641 = vlaneseq
    %v642 = vshrl.u32 %v641, 7
    %v643 = vsub.s32 %v640, %v642
    %v644 = vrot.slane %v589, %v643
    %v646 = vunpack.c.l.s4 1983009808
    %v647 = vunpack.c.0.s8 %v646
    %v648 = vlaneseq
    %v649 = vshrl.u32 %v648, 7
    %v650 = vsub.s32 %v647, %v649
    %v651 = vrot.slane %v637, %v650
    %v652 = vcombine.high %v644, %v644
    %v653 = vcombine.high %v651, %v651
    %v654 = vcombine.high %v590, %v590
    %v656 = vunpack.c.l.s4 1983009808
    %v657 = vunpack.c.0.s8 %v656
    %v658 = vlaneseq
    %v659 = vshrl.u32 %v658, 7
    %v660 = vsub.s32 %v657, %v659
    %v661 = vrot.slane %v590, %v660
    %v663 = vunpack.c.l.s4 1983009808
    %v664 = vunpack.c.0.s8 %v663
    %v665 = vlaneseq
    %v666 = vshrl.u32 %v665, 7
    %v667 = vsub.s32 %v664, %v666
    %v668 = vrot.slane %v654, %v667
    %v669 = vcombine.high %v661, %v661
    %v670 = vcombine.high %v668, %v668
    %v671 = vcombine.high %v591, %v591
    %v673 = vunpack.c.l.s4 1983009808
    %v674 = vunpack.c.0.s8 %v673
    %v675 = vlaneseq
    %v676 = vshrl.u32 %v675, 7
    %v677 = vsub.s32 %v674, %v676
    %v678 = vrot.slane %v591, %v677
    %v680 = vunpack.c.l.s4 1983009808
    %v681 = vunpack.c.0.s8 %v680
    %v682 = vlaneseq
    %v683 = vshrl.u32 %v682, 7
    %v684 = vsub.s32 %v681, %v683
    %v685 = vrot.slane %v671, %v684
    %v686 = vcombine.high %v678, %v678
    %v687 = vcombine.high %v685, %v685
    %v688 = vcombine.high %v592, %v592
    %v690 = vunpack.c.l.s4 1983009808
    %v691 = vunpack.c.0.s8 %v690
    %v692 = vlaneseq
    %v693 = vshrl.u32 %v692, 7
    %v694 = vsub.s32 %v691, %v693
    %v695 = vrot.slane %v592, %v694
    %v697 = vunpack.c.l.s4 1983009808
    %v698 = vunpack.c.0.s8 %v697
    %v699 = vlaneseq
    %v700 = vshrl.u32 %v699, 7
    %v701 = vsub.s32 %v698, %v700
    %v702 = vrot.slane %v688, %v701
    %v703 = vcombine.high %v695, %v695
    %v704 = vcombine.high %v702, %v702
    %v705 = vcombine.high %v593, %v593
    %v707 = vunpack.c.l.s4 1983009808
    %v708 = vunpack.c.0.s8 %v707
    %v709 = vlaneseq
    %v710 = vshrl.u32 %v709, 7
    %v711 = vsub.s32 %v708, %v710
    %v712 = vrot.slane %v593, %v711
    %v714 = vunpack.c.l.s4 1983009808
    %v715 = vunpack.c.0.s8 %v714
    %v716 = vlaneseq
    %v717 = vshrl.u32 %v716, 7
    %v718 = vsub.s32 %v715, %v717
    %v719 = vrot.slane %v705, %v718
    %v720 = vcombine.high %v712, %v712
    %v721 = vcombine.high %v719, %v719
    %v722 = vcombine.high %v594, %v594
    %v724 = vunpack.c.l.s4 1983009808
    %v725 = vunpack.c.0.s8 %v724
    %v726 = vlaneseq
    %v727 = vshrl.u32 %v726, 7
    %v728 = vsub.s32 %v725, %v727
    %v729 = vrot.slane %v594, %v728
    %v731 = vunpack.c.l.s4 1983009808
    %v732 = vunpack.c.0.s8 %v731
    %v733 = vlaneseq
    %v734 = vshrl.u32 %v733, 7
    %v735 = vsub.s32 %v732, %v734
    %v736 = vrot.slane %v722, %v735
    %v737 = vcombine.high %v729, %v729
    %v738 = vcombine.high %v736, %v736
    %771 = vmatprep.subr.mxu0 0.0
    %772 = vmatpush1.msra.mxu0 %v75
    %773 = vmatprep.subr.mxu0 0.0
    %774 = vmatpush1.msra.mxu0 %v76
    %775 = vmatprep.subr.mxu0 0.0
    %776 = vmatpush1.msra.mxu0 %v77
    %777 = vmatprep.subr.mxu0 0.0
    %778 = vmatpush1.msra.mxu0 %v78
    %779 = vmatprep.subr.mxu0 0.0
    %780 = vmatpush1.msra.mxu0 %v79
    %781 = vmatprep.subr.mxu0 0.0
    %782 = vmatpush1.msra.mxu0 %v80
    %783 = vmatprep.subr.mxu0 0.0
    %784 = vmatpush1.msra.mxu0 %v81
    %785 = vmatprep.subr.mxu0 0.0
    %786 = vmatpush1.msra.mxu0 %v82
    %787 = vmatprep.subr.mxu0 0.0
    %788 = vmatpush1.msra.mxu0 %v83
    %789 = vmatprep.subr.mxu0 0.0
    %790 = vmatpush1.msra.mxu0 %v84
    %791 = vmatprep.subr.mxu0 0.0
    %792 = vmatpush1.msra.mxu0 %v85
    %793 = vmatprep.subr.mxu0 0.0
    %794 = vmatpush1.msra.mxu0 %v86
    %795 = vmatprep.subr.mxu0 0.0
    %796 = vmatpush1.msra.mxu0 %v87
    %797 = vmatprep.subr.mxu0 0.0
    %798 = vmatpush1.msra.mxu0 %v88
    %799 = vmatprep.subr.mxu0 0.0
    %800 = vmatpush1.msra.mxu0 %v89
    %801 = vmatprep.subr.mxu0 0.0
    %802 = vmatpush1.msra.mxu0 %v90
    %803 = vmatprep.subr.mxu0 0.0
    %804 = vmatpush1.msra.mxu0 %v91
    %805 = vmatprep.subr.mxu0 0.0
    %806 = vmatpush1.msra.mxu0 %v92
    %807 = vmatprep.subr.mxu0 0.0
    %808 = vmatpush1.msra.mxu0 %v93
    %809 = vmatprep.subr.mxu0 0.0
    %810 = vmatpush1.msra.mxu0 %v94
    %811 = vmatprep.subr.mxu0 0.0
    %812 = vmatpush1.msra.mxu0 %v95
    %813 = vmatprep.subr.mxu0 0.0
    %814 = vmatpush1.msra.mxu0 %v96
    %815 = vmatprep.subr.mxu0 0.0
    %816 = vmatpush1.msra.mxu0 %v97
    %817 = vmatprep.subr.mxu0 0.0
    %818 = vmatpush1.msra.mxu0 %v98
    %819 = vmatprep.subr.mxu0 0.0
    %820 = vmatpush1.msra.mxu0 %v99
    %821 = vmatprep.subr.mxu0 0.0
    %822 = vmatpush1.msra.mxu0 %v100
    %823 = vmatprep.subr.mxu0 0.0
    %824 = vmatpush1.msra.mxu0 %v101
    %825 = vmatprep.subr.mxu0 0.0
    %826 = vmatpush1.msra.mxu0 %v102
    %827 = vmatprep.subr.mxu0 0.0
    %828 = vmatpush1.msra.mxu0 %v103
    %829 = vmatprep.subr.mxu0 0.0
    %830 = vmatpush1.msra.mxu0 %v104
    %831 = vmatprep.subr.mxu0 0.0
    %832 = vmatpush1.msra.mxu0 %v105
    %833 = vmatprep.subr.mxu0 0.0
    %834 = vmatpush1.msra.mxu0 %v106
    %835 = vmatprep.mubr.f32.mxu0 %v618
    %836 = vmatmul.mubr.f32.gmra.mrb[0].mxu0 %v610
    %v837 = vpop.f32.mrb[0].mxu0
    %v838 = vadd.f32 0.0, %v837
    %v839 = vpop.f32.mrb[0].mxu0
    %840 = vdwg.mxu0
    %841 = vmatprep.subr.mxu0 0.0
    %842 = vmatpush1.msra.mxu0 %v107
    %843 = vmatprep.subr.mxu0 0.0
    %844 = vmatpush1.msra.mxu0 %v108
    %845 = vmatprep.subr.mxu0 0.0
    %846 = vmatpush1.msra.mxu0 %v109
    %847 = vmatprep.subr.mxu0 0.0
    %848 = vmatpush1.msra.mxu0 %v110
    %849 = vmatprep.subr.mxu0 0.0
    %850 = vmatpush1.msra.mxu0 %v111
    %851 = vmatprep.subr.mxu0 0.0
    %852 = vmatpush1.msra.mxu0 %v112
    %853 = vmatprep.subr.mxu0 0.0
    %854 = vmatpush1.msra.mxu0 %v113
    %855 = vmatprep.subr.mxu0 0.0
    %856 = vmatpush1.msra.mxu0 %v114
    %857 = vmatprep.subr.mxu0 0.0
    %858 = vmatpush1.msra.mxu0 %v115
    %859 = vmatprep.subr.mxu0 0.0
    %860 = vmatpush1.msra.mxu0 %v116
    %861 = vmatprep.subr.mxu0 0.0
    %862 = vmatpush1.msra.mxu0 %v117
    %863 = vmatprep.subr.mxu0 0.0
    %864 = vmatpush1.msra.mxu0 %v118
    %865 = vmatprep.subr.mxu0 0.0
    %866 = vmatpush1.msra.mxu0 %v119
    %867 = vmatprep.subr.mxu0 0.0
    %868 = vmatpush1.msra.mxu0 %v120
    %869 = vmatprep.subr.mxu0 0.0
    %870 = vmatpush1.msra.mxu0 %v121
    %871 = vmatprep.subr.mxu0 0.0
    %872 = vmatpush1.msra.mxu0 %v122
    %873 = vmatprep.subr.mxu0 0.0
    %874 = vmatpush1.msra.mxu0 %v123
    %875 = vmatprep.subr.mxu0 0.0
    %876 = vmatpush1.msra.mxu0 %v124
    %877 = vmatprep.subr.mxu0 0.0
    %878 = vmatpush1.msra.mxu0 %v125
    %879 = vmatprep.subr.mxu0 0.0
    %880 = vmatpush1.msra.mxu0 %v126
    %881 = vmatprep.subr.mxu0 0.0
    %882 = vmatpush1.msra.mxu0 %v127
    %883 = vmatprep.subr.mxu0 0.0
    %884 = vmatpush1.msra.mxu0 %v128
    %885 = vmatprep.subr.mxu0 0.0
    %886 = vmatpush1.msra.mxu0 %v129
    %887 = vmatprep.subr.mxu0 0.0
    %888 = vmatpush1.msra.mxu0 %v130
    %889 = vmatprep.subr.mxu0 0.0
    %890 = vmatpush1.msra.mxu0 %v131
    %891 = vmatprep.subr.mxu0 0.0
    %892 = vmatpush1.msra.mxu0 %v132
    %893 = vmatprep.subr.mxu0 0.0
    %894 = vmatpush1.msra.mxu0 %v133
    %895 = vmatprep.subr.mxu0 0.0
    %896 = vmatpush1.msra.mxu0 %v134
    %897 = vmatprep.subr.mxu0 0.0
    %898 = vmatpush1.msra.mxu0 %v135
    %899 = vmatprep.subr.mxu0 0.0
    %900 = vmatpush1.msra.mxu0 %v136
    %901 = vmatprep.subr.mxu0 0.0
    %902 = vmatpush1.msra.mxu0 %v137
    %903 = vmatprep.subr.mxu0 0.0
    %904 = vmatpush1.msra.mxu0 %v138
    %905 = vmatprep.mubr.f32.mxu0 %v619
    %906 = vmatmul.mubr.f32.gmra.mrb[0].mxu0 %v617
    %v907 = vpop.f32.mrb[0].mxu0
    %v908 = vadd.f32 %v838, %v907
    %v909 = vpop.f32.mrb[0].mxu0
    %910 = vdwg.mxu0
    %911 = vmatprep.subr.mxu0 0.0
    %912 = vmatpush1.msra.mxu0 %v139
    %913 = vmatprep.subr.mxu0 0.0
    %914 = vmatpush1.msra.mxu0 %v140
    %915 = vmatprep.subr.mxu0 0.0
    %916 = vmatpush1.msra.mxu0 %v141
    %917 = vmatprep.subr.mxu0 0.0
    %918 = vmatpush1.msra.mxu0 %v142
    %919 = vmatprep.subr.mxu0 0.0
    %920 = vmatpush1.msra.mxu0 %v143
    %921 = vmatprep.subr.mxu0 0.0
    %922 = vmatpush1.msra.mxu0 %v144
    %923 = vmatprep.subr.mxu0 0.0
    %924 = vmatpush1.msra.mxu0 %v145
    %925 = vmatprep.subr.mxu0 0.0
    %926 = vmatpush1.msra.mxu0 %v146
    %927 = vmatprep.subr.mxu0 0.0
    %928 = vmatpush1.msra.mxu0 %v147
    %929 = vmatprep.subr.mxu0 0.0
    %930 = vmatpush1.msra.mxu0 %v148
    %931 = vmatprep.subr.mxu0 0.0
    %932 = vmatpush1.msra.mxu0 %v149
    %933 = vmatprep.subr.mxu0 0.0
    %934 = vmatpush1.msra.mxu0 %v150
    %935 = vmatprep.subr.mxu0 0.0
    %936 = vmatpush1.msra.mxu0 %v151
    %937 = vmatprep.subr.mxu0 0.0
    %938 = vmatpush1.msra.mxu0 %v152
    %939 = vmatprep.subr.mxu0 0.0
    %940 = vmatpush1.msra.mxu0 %v153
    %941 = vmatprep.subr.mxu0 0.0
    %942 = vmatpush1.msra.mxu0 %v154
    %943 = vmatprep.subr.mxu0 0.0
    %944 = vmatpush1.msra.mxu0 %v155
    %945 = vmatprep.subr.mxu0 0.0
    %946 = vmatpush1.msra.mxu0 %v156
    %947 = vmatprep.subr.mxu0 0.0
    %948 = vmatpush1.msra.mxu0 %v157
    %949 = vmatprep.subr.mxu0 0.0
    %950 = vmatpush1.msra.mxu0 %v158
    %951 = vmatprep.subr.mxu0 0.0
    %952 = vmatpush1.msra.mxu0 %v159
    %953 = vmatprep.subr.mxu0 0.0
    %954 = vmatpush1.msra.mxu0 %v160
    %955 = vmatprep.subr.mxu0 0.0
    %956 = vmatpush1.msra.mxu0 %v161
    %957 = vmatprep.subr.mxu0 0.0
    %958 = vmatpush1.msra.mxu0 %v162
    %959 = vmatprep.subr.mxu0 0.0
    %960 = vmatpush1.msra.mxu0 %v163
    %961 = vmatprep.subr.mxu0 0.0
    %962 = vmatpush1.msra.mxu0 %v164
    %963 = vmatprep.subr.mxu0 0.0
    %964 = vmatpush1.msra.mxu0 %v165
    %965 = vmatprep.subr.mxu0 0.0
    %966 = vmatpush1.msra.mxu0 %v166
    %967 = vmatprep.subr.mxu0 0.0
    %968 = vmatpush1.msra.mxu0 %v167
    %969 = vmatprep.subr.mxu0 0.0
    %970 = vmatpush1.msra.mxu0 %v168
    %971 = vmatprep.subr.mxu0 0.0
    %972 = vmatpush1.msra.mxu0 %v169
    %973 = vmatprep.subr.mxu0 0.0
    %974 = vmatpush1.msra.mxu0 %v170
    %975 = vmatprep.mubr.f32.mxu0 %v635
    %976 = vmatmul.mubr.f32.gmra.mrb[0].mxu0 %v627
    %v977 = vpop.f32.mrb[0].mxu0
    %v978 = vadd.f32 %v908, %v977
    %v979 = vpop.f32.mrb[0].mxu0
    %980 = vdwg.mxu0
    %981 = vmatprep.subr.mxu0 0.0
    %982 = vmatpush1.msra.mxu0 %v171
    %983 = vmatprep.subr.mxu0 0.0
    %984 = vmatpush1.msra.mxu0 %v172
    %985 = vmatprep.subr.mxu0 0.0
    %986 = vmatpush1.msra.mxu0 %v173
    %987 = vmatprep.subr.mxu0 0.0
    %988 = vmatpush1.msra.mxu0 %v174
    %989 = vmatprep.subr.mxu0 0.0
    %990 = vmatpush1.msra.mxu0 %v175
    %991 = vmatprep.subr.mxu0 0.0
    %992 = vmatpush1.msra.mxu0 %v176
    %993 = vmatprep.subr.mxu0 0.0
    %994 = vmatpush1.msra.mxu0 %v177
    %995 = vmatprep.subr.mxu0 0.0
    %996 = vmatpush1.msra.mxu0 %v178
    %997 = vmatprep.subr.mxu0 0.0
    %998 = vmatpush1.msra.mxu0 %v179
    %999 = vmatprep.subr.mxu0 0.0
    %1000 = vmatpush1.msra.mxu0 %v180
    %1001 = vmatprep.subr.mxu0 0.0
    %1002 = vmatpush1.msra.mxu0 %v181
    %1003 = vmatprep.subr.mxu0 0.0
    %1004 = vmatpush1.msra.mxu0 %v182
    %1005 = vmatprep.subr.mxu0 0.0
    %1006 = vmatpush1.msra.mxu0 %v183
    %1007 = vmatprep.subr.mxu0 0.0
    %1008 = vmatpush1.msra.mxu0 %v184
    %1009 = vmatprep.subr.mxu0 0.0
    %1010 = vmatpush1.msra.mxu0 %v185
    %1011 = vmatprep.subr.mxu0 0.0
    %1012 = vmatpush1.msra.mxu0 %v186
    %1013 = vmatprep.subr.mxu0 0.0
    %1014 = vmatpush1.msra.mxu0 %v187
    %1015 = vmatprep.subr.mxu0 0.0
    %1016 = vmatpush1.msra.mxu0 %v188
    %1017 = vmatprep.subr.mxu0 0.0
    %1018 = vmatpush1.msra.mxu0 %v189
    %1019 = vmatprep.subr.mxu0 0.0
    %1020 = vmatpush1.msra.mxu0 %v190
    %1021 = vmatprep.subr.mxu0 0.0
    %1022 = vmatpush1.msra.mxu0 %v191
    %1023 = vmatprep.subr.mxu0 0.0
    %1024 = vmatpush1.msra.mxu0 %v192
    %1025 = vmatprep.subr.mxu0 0.0
    %1026 = vmatpush1.msra.mxu0 %v193
    %1027 = vmatprep.subr.mxu0 0.0
    %1028 = vmatpush1.msra.mxu0 %v194
    %1029 = vmatprep.subr.mxu0 0.0
    %1030 = vmatpush1.msra.mxu0 %v195
    %1031 = vmatprep.subr.mxu0 0.0
    %1032 = vmatpush1.msra.mxu0 %v196
    %1033 = vmatprep.subr.mxu0 0.0
    %1034 = vmatpush1.msra.mxu0 %v197
    %1035 = vmatprep.subr.mxu0 0.0
    %1036 = vmatpush1.msra.mxu0 %v198
    %1037 = vmatprep.subr.mxu0 0.0
    %1038 = vmatpush1.msra.mxu0 %v199
    %1039 = vmatprep.subr.mxu0 0.0
    %1040 = vmatpush1.msra.mxu0 %v200
    %1041 = vmatprep.subr.mxu0 0.0
    %1042 = vmatpush1.msra.mxu0 %v201
    %1043 = vmatprep.subr.mxu0 0.0
    %1044 = vmatpush1.msra.mxu0 %v202
    %1045 = vmatprep.mubr.f32.mxu0 %v636
    %1046 = vmatmul.mubr.f32.gmra.mrb[0].mxu0 %v634
    %v1047 = vpop.f32.mrb[0].mxu0
    %v1048 = vadd.f32 %v978, %v1047
    %v1049 = vpop.f32.mrb[0].mxu0
    %1050 = vdwg.mxu0
    %1051 = vmatprep.subr.mxu0 0.0
    %1052 = vmatpush1.msra.mxu0 %v203
    %1053 = vmatprep.subr.mxu0 0.0
    %1054 = vmatpush1.msra.mxu0 %v204
    %1055 = vmatprep.subr.mxu0 0.0
    %1056 = vmatpush1.msra.mxu0 %v205
    %1057 = vmatprep.subr.mxu0 0.0
    %1058 = vmatpush1.msra.mxu0 %v206
    %1059 = vmatprep.subr.mxu0 0.0
    %1060 = vmatpush1.msra.mxu0 %v207
    %1061 = vmatprep.subr.mxu0 0.0
    %1062 = vmatpush1.msra.mxu0 %v208
    %1063 = vmatprep.subr.mxu0 0.0
    %1064 = vmatpush1.msra.mxu0 %v209
    %1065 = vmatprep.subr.mxu0 0.0
    %1066 = vmatpush1.msra.mxu0 %v210
    %1067 = vmatprep.subr.mxu0 0.0
    %1068 = vmatpush1.msra.mxu0 %v211
    %1069 = vmatprep.subr.mxu0 0.0
    %1070 = vmatpush1.msra.mxu0 %v212
    %1071 = vmatprep.subr.mxu0 0.0
    %1072 = vmatpush1.msra.mxu0 %v213
    %1073 = vmatprep.subr.mxu0 0.0
    %1074 = vmatpush1.msra.mxu0 %v214
    %1075 = vmatprep.subr.mxu0 0.0
    %1076 = vmatpush1.msra.mxu0 %v215
    %1077 = vmatprep.subr.mxu0 0.0
    %1078 = vmatpush1.msra.mxu0 %v216
    %1079 = vmatprep.subr.mxu0 0.0
    %1080 = vmatpush1.msra.mxu0 %v217
    %1081 = vmatprep.subr.mxu0 0.0
    %1082 = vmatpush1.msra.mxu0 %v218
    %1083 = vmatprep.subr.mxu0 0.0
    %1084 = vmatpush1.msra.mxu0 %v219
    %1085 = vmatprep.subr.mxu0 0.0
    %1086 = vmatpush1.msra.mxu0 %v220
    %1087 = vmatprep.subr.mxu0 0.0
    %1088 = vmatpush1.msra.mxu0 %v221
    %1089 = vmatprep.subr.mxu0 0.0
    %1090 = vmatpush1.msra.mxu0 %v222
    %1091 = vmatprep.subr.mxu0 0.0
    %1092 = vmatpush1.msra.mxu0 %v223
    %1093 = vmatprep.subr.mxu0 0.0
    %1094 = vmatpush1.msra.mxu0 %v224
    %1095 = vmatprep.subr.mxu0 0.0
    %1096 = vmatpush1.msra.mxu0 %v225
    %1097 = vmatprep.subr.mxu0 0.0
    %1098 = vmatpush1.msra.mxu0 %v226
    %1099 = vmatprep.subr.mxu0 0.0
    %1100 = vmatpush1.msra.mxu0 %v227
    %1101 = vmatprep.subr.mxu0 0.0
    %1102 = vmatpush1.msra.mxu0 %v228
    %1103 = vmatprep.subr.mxu0 0.0
    %1104 = vmatpush1.msra.mxu0 %v229
    %1105 = vmatprep.subr.mxu0 0.0
    %1106 = vmatpush1.msra.mxu0 %v230
    %1107 = vmatprep.subr.mxu0 0.0
    %1108 = vmatpush1.msra.mxu0 %v231
    %1109 = vmatprep.subr.mxu0 0.0
    %1110 = vmatpush1.msra.mxu0 %v232
    %1111 = vmatprep.subr.mxu0 0.0
    %1112 = vmatpush1.msra.mxu0 %v233
    %1113 = vmatprep.subr.mxu0 0.0
    %1114 = vmatpush1.msra.mxu0 %v234
    %1115 = vmatprep.mubr.f32.mxu0 %v652
    %1116 = vmatmul.mubr.f32.gmra.mrb[0].mxu0 %v644
    %v1117 = vpop.f32.mrb[0].mxu0
    %v1118 = vadd.f32 %v1048, %v1117
    %v1119 = vpop.f32.mrb[0].mxu0
    %1120 = vdwg.mxu0
    %1121 = vmatprep.subr.mxu0 0.0
    %1122 = vmatpush1.msra.mxu0 %v235
    %1123 = vmatprep.subr.mxu0 0.0
    %1124 = vmatpush1.msra.mxu0 %v236
    %1125 = vmatprep.subr.mxu0 0.0
    %1126 = vmatpush1.msra.mxu0 %v237
    %1127 = vmatprep.subr.mxu0 0.0
    %1128 = vmatpush1.msra.mxu0 %v238
    %1129 = vmatprep.subr.mxu0 0.0
    %1130 = vmatpush1.msra.mxu0 %v239
    %1131 = vmatprep.subr.mxu0 0.0
    %1132 = vmatpush1.msra.mxu0 %v240
    %1133 = vmatprep.subr.mxu0 0.0
    %1134 = vmatpush1.msra.mxu0 %v241
    %1135 = vmatprep.subr.mxu0 0.0
    %1136 = vmatpush1.msra.mxu0 %v242
    %1137 = vmatprep.subr.mxu0 0.0
    %1138 = vmatpush1.msra.mxu0 %v243
    %1139 = vmatprep.subr.mxu0 0.0
    %1140 = vmatpush1.msra.mxu0 %v244
    %1141 = vmatprep.subr.mxu0 0.0
    %1142 = vmatpush1.msra.mxu0 %v245
    %1143 = vmatprep.subr.mxu0 0.0
    %1144 = vmatpush1.msra.mxu0 %v246
    %1145 = vmatprep.subr.mxu0 0.0
    %1146 = vmatpush1.msra.mxu0 %v247
    %1147 = vmatprep.subr.mxu0 0.0
    %1148 = vmatpush1.msra.mxu0 %v248
    %1149 = vmatprep.subr.mxu0 0.0
    %1150 = vmatpush1.msra.mxu0 %v249
    %1151 = vmatprep.subr.mxu0 0.0
    %1152 = vmatpush1.msra.mxu0 %v250
    %1153 = vmatprep.subr.mxu0 0.0
    %1154 = vmatpush1.msra.mxu0 %v251
    %1155 = vmatprep.subr.mxu0 0.0
    %1156 = vmatpush1.msra.mxu0 %v252
    %1157 = vmatprep.subr.mxu0 0.0
    %1158 = vmatpush1.msra.mxu0 %v253
    %1159 = vmatprep.subr.mxu0 0.0
    %1160 = vmatpush1.msra.mxu0 %v254
    %1161 = vmatprep.subr.mxu0 0.0
    %1162 = vmatpush1.msra.mxu0 %v255
    %1163 = vmatprep.subr.mxu0 0.0
    %1164 = vmatpush1.msra.mxu0 %v256
    %1165 = vmatprep.subr.mxu0 0.0
    %1166 = vmatpush1.msra.mxu0 %v257
    %1167 = vmatprep.subr.mxu0 0.0
    %1168 = vmatpush1.msra.mxu0 %v258
    %1169 = vmatprep.subr.mxu0 0.0
    %1170 = vmatpush1.msra.mxu0 %v259
    %1171 = vmatprep.subr.mxu0 0.0
    %1172 = vmatpush1.msra.mxu0 %v260
    %1173 = vmatprep.subr.mxu0 0.0
    %1174 = vmatpush1.msra.mxu0 %v261
    %1175 = vmatprep.subr.mxu0 0.0
    %1176 = vmatpush1.msra.mxu0 %v262
    %1177 = vmatprep.subr.mxu0 0.0
    %1178 = vmatpush1.msra.mxu0 %v263
    %1179 = vmatprep.subr.mxu0 0.0
    %1180 = vmatpush1.msra.mxu0 %v264
    %1181 = vmatprep.subr.mxu0 0.0
    %1182 = vmatpush1.msra.mxu0 %v265
    %1183 = vmatprep.subr.mxu0 0.0
    %1184 = vmatpush1.msra.mxu0 %v266
    %1185 = vmatprep.mubr.f32.mxu0 %v653
    %1186 = vmatmul.mubr.f32.gmra.mrb[0].mxu0 %v651
    %v1187 = vpop.f32.mrb[0].mxu0
    %v1188 = vadd.f32 %v1118, %v1187
    %v1189 = vpop.f32.mrb[0].mxu0
    %1190 = vdwg.mxu0
    %1191 = vmatprep.subr.mxu0 0.0
    %1192 = vmatpush1.msra.mxu0 %v267
    %1193 = vmatprep.subr.mxu0 0.0
    %1194 = vmatpush1.msra.mxu0 %v268
    %1195 = vmatprep.subr.mxu0 0.0
    %1196 = vmatpush1.msra.mxu0 %v269
    %1197 = vmatprep.subr.mxu0 0.0
    %1198 = vmatpush1.msra.mxu0 %v270
    %1199 = vmatprep.subr.mxu0 0.0
    %1200 = vmatpush1.msra.mxu0 %v271
    %1201 = vmatprep.subr.mxu0 0.0
    %1202 = vmatpush1.msra.mxu0 %v272
    %1203 = vmatprep.subr.mxu0 0.0
    %1204 = vmatpush1.msra.mxu0 %v273
    %1205 = vmatprep.subr.mxu0 0.0
    %1206 = vmatpush1.msra.mxu0 %v274
    %1207 = vmatprep.subr.mxu0 0.0
    %1208 = vmatpush1.msra.mxu0 %v275
    %1209 = vmatprep.subr.mxu0 0.0
    %1210 = vmatpush1.msra.mxu0 %v276
    %1211 = vmatprep.subr.mxu0 0.0
    %1212 = vmatpush1.msra.mxu0 %v277
    %1213 = vmatprep.subr.mxu0 0.0
    %1214 = vmatpush1.msra.mxu0 %v278
    %1215 = vmatprep.subr.mxu0 0.0
    %1216 = vmatpush1.msra.mxu0 %v279
    %1217 = vmatprep.subr.mxu0 0.0
    %1218 = vmatpush1.msra.mxu0 %v280
    %1219 = vmatprep.subr.mxu0 0.0
    %1220 = vmatpush1.msra.mxu0 %v281
    %1221 = vmatprep.subr.mxu0 0.0
    %1222 = vmatpush1.msra.mxu0 %v282
    %1223 = vmatprep.subr.mxu0 0.0
    %1224 = vmatpush1.msra.mxu0 %v283
    %1225 = vmatprep.subr.mxu0 0.0
    %1226 = vmatpush1.msra.mxu0 %v284
    %1227 = vmatprep.subr.mxu0 0.0
    %1228 = vmatpush1.msra.mxu0 %v285
    %1229 = vmatprep.subr.mxu0 0.0
    %1230 = vmatpush1.msra.mxu0 %v286
    %1231 = vmatprep.subr.mxu0 0.0
    %1232 = vmatpush1.msra.mxu0 %v287
    %1233 = vmatprep.subr.mxu0 0.0
    %1234 = vmatpush1.msra.mxu0 %v288
    %1235 = vmatprep.subr.mxu0 0.0
    %1236 = vmatpush1.msra.mxu0 %v289
    %1237 = vmatprep.subr.mxu0 0.0
    %1238 = vmatpush1.msra.mxu0 %v290
    %1239 = vmatprep.subr.mxu0 0.0
    %1240 = vmatpush1.msra.mxu0 %v291
    %1241 = vmatprep.subr.mxu0 0.0
    %1242 = vmatpush1.msra.mxu0 %v292
    %1243 = vmatprep.subr.mxu0 0.0
    %1244 = vmatpush1.msra.mxu0 %v293
    %1245 = vmatprep.subr.mxu0 0.0
    %1246 = vmatpush1.msra.mxu0 %v294
    %1247 = vmatprep.subr.mxu0 0.0
    %1248 = vmatpush1.msra.mxu0 %v295
    %1249 = vmatprep.subr.mxu0 0.0
    %1250 = vmatpush1.msra.mxu0 %v296
    %1251 = vmatprep.subr.mxu0 0.0
    %1252 = vmatpush1.msra.mxu0 %v297
    %1253 = vmatprep.subr.mxu0 0.0
    %1254 = vmatpush1.msra.mxu0 %v298
    %1255 = vmatprep.mubr.f32.mxu0 %v669
    %1256 = vmatmul.mubr.f32.gmra.mrb[0].mxu0 %v661
    %v1257 = vpop.f32.mrb[0].mxu0
    %v1258 = vadd.f32 %v1188, %v1257
    %v1259 = vpop.f32.mrb[0].mxu0
    %1260 = vdwg.mxu0
    %1261 = vmatprep.subr.mxu0 0.0
    %1262 = vmatpush1.msra.mxu0 %v299
    %1263 = vmatprep.subr.mxu0 0.0
    %1264 = vmatpush1.msra.mxu0 %v300
    %1265 = vmatprep.subr.mxu0 0.0
    %1266 = vmatpush1.msra.mxu0 %v301
    %1267 = vmatprep.subr.mxu0 0.0
    %1268 = vmatpush1.msra.mxu0 %v302
    %1269 = vmatprep.subr.mxu0 0.0
    %1270 = vmatpush1.msra.mxu0 %v303
    %1271 = vmatprep.subr.mxu0 0.0
    %1272 = vmatpush1.msra.mxu0 %v304
    %1273 = vmatprep.subr.mxu0 0.0
    %1274 = vmatpush1.msra.mxu0 %v305
    %1275 = vmatprep.subr.mxu0 0.0
    %1276 = vmatpush1.msra.mxu0 %v306
    %1277 = vmatprep.subr.mxu0 0.0
    %1278 = vmatpush1.msra.mxu0 %v307
    %1279 = vmatprep.subr.mxu0 0.0
    %1280 = vmatpush1.msra.mxu0 %v308
    %1281 = vmatprep.subr.mxu0 0.0
    %1282 = vmatpush1.msra.mxu0 %v309
    %1283 = vmatprep.subr.mxu0 0.0
    %1284 = vmatpush1.msra.mxu0 %v310
    %1285 = vmatprep.subr.mxu0 0.0
    %1286 = vmatpush1.msra.mxu0 %v311
    %1287 = vmatprep.subr.mxu0 0.0
    %1288 = vmatpush1.msra.mxu0 %v312
    %1289 = vmatprep.subr.mxu0 0.0
    %1290 = vmatpush1.msra.mxu0 %v313
    %1291 = vmatprep.subr.mxu0 0.0
    %1292 = vmatpush1.msra.mxu0 %v314
    %1293 = vmatprep.subr.mxu0 0.0
    %1294 = vmatpush1.msra.mxu0 %v315
    %1295 = vmatprep.subr.mxu0 0.0
    %1296 = vmatpush1.msra.mxu0 %v316
    %1297 = vmatprep.subr.mxu0 0.0
    %1298 = vmatpush1.msra.mxu0 %v317
    %1299 = vmatprep.subr.mxu0 0.0
    %1300 = vmatpush1.msra.mxu0 %v318
    %1301 = vmatprep.subr.mxu0 0.0
    %1302 = vmatpush1.msra.mxu0 %v319
    %1303 = vmatprep.subr.mxu0 0.0
    %1304 = vmatpush1.msra.mxu0 %v320
    %1305 = vmatprep.subr.mxu0 0.0
    %1306 = vmatpush1.msra.mxu0 %v321
    %1307 = vmatprep.subr.mxu0 0.0
    %1308 = vmatpush1.msra.mxu0 %v322
    %1309 = vmatprep.subr.mxu0 0.0
    %1310 = vmatpush1.msra.mxu0 %v323
    %1311 = vmatprep.subr.mxu0 0.0
    %1312 = vmatpush1.msra.mxu0 %v324
    %1313 = vmatprep.subr.mxu0 0.0
    %1314 = vmatpush1.msra.mxu0 %v325
    %1315 = vmatprep.subr.mxu0 0.0
    %1316 = vmatpush1.msra.mxu0 %v326
    %1317 = vmatprep.subr.mxu0 0.0
    %1318 = vmatpush1.msra.mxu0 %v327
    %1319 = vmatprep.subr.mxu0 0.0
    %1320 = vmatpush1.msra.mxu0 %v328
    %1321 = vmatprep.subr.mxu0 0.0
    %1322 = vmatpush1.msra.mxu0 %v329
    %1323 = vmatprep.subr.mxu0 0.0
    %1324 = vmatpush1.msra.mxu0 %v330
    %1325 = vmatprep.mubr.f32.mxu0 %v670
    %1326 = vmatmul.mubr.f32.gmra.mrb[0].mxu0 %v668
    %v1327 = vpop.f32.mrb[0].mxu0
    %v1328 = vadd.f32 %v1258, %v1327
    %v1329 = vpop.f32.mrb[0].mxu0
    %1330 = vdwg.mxu0
    %1331 = vmatprep.subr.mxu0 0.0
    %1332 = vmatpush1.msra.mxu0 %v331
    %1333 = vmatprep.subr.mxu0 0.0
    %1334 = vmatpush1.msra.mxu0 %v332
    %1335 = vmatprep.subr.mxu0 0.0
    %1336 = vmatpush1.msra.mxu0 %v333
    %1337 = vmatprep.subr.mxu0 0.0
    %1338 = vmatpush1.msra.mxu0 %v334
    %1339 = vmatprep.subr.mxu0 0.0
    %1340 = vmatpush1.msra.mxu0 %v335
    %1341 = vmatprep.subr.mxu0 0.0
    %1342 = vmatpush1.msra.mxu0 %v336
    %1343 = vmatprep.subr.mxu0 0.0
    %1344 = vmatpush1.msra.mxu0 %v337
    %1345 = vmatprep.subr.mxu0 0.0
    %1346 = vmatpush1.msra.mxu0 %v338
    %1347 = vmatprep.subr.mxu0 0.0
    %1348 = vmatpush1.msra.mxu0 %v339
    %1349 = vmatprep.subr.mxu0 0.0
    %1350 = vmatpush1.msra.mxu0 %v340
    %1351 = vmatprep.subr.mxu0 0.0
    %1352 = vmatpush1.msra.mxu0 %v341
    %1353 = vmatprep.subr.mxu0 0.0
    %1354 = vmatpush1.msra.mxu0 %v342
    %1355 = vmatprep.subr.mxu0 0.0
    %1356 = vmatpush1.msra.mxu0 %v343
    %1357 = vmatprep.subr.mxu0 0.0
    %1358 = vmatpush1.msra.mxu0 %v344
    %1359 = vmatprep.subr.mxu0 0.0
    %1360 = vmatpush1.msra.mxu0 %v345
    %1361 = vmatprep.subr.mxu0 0.0
    %1362 = vmatpush1.msra.mxu0 %v346
    %1363 = vmatprep.subr.mxu0 0.0
    %1364 = vmatpush1.msra.mxu0 %v347
    %1365 = vmatprep.subr.mxu0 0.0
    %1366 = vmatpush1.msra.mxu0 %v348
    %1367 = vmatprep.subr.mxu0 0.0
    %1368 = vmatpush1.msra.mxu0 %v349
    %1369 = vmatprep.subr.mxu0 0.0
    %1370 = vmatpush1.msra.mxu0 %v350
    %1371 = vmatprep.subr.mxu0 0.0
    %1372 = vmatpush1.msra.mxu0 %v351
    %1373 = vmatprep.subr.mxu0 0.0
    %1374 = vmatpush1.msra.mxu0 %v352
    %1375 = vmatprep.subr.mxu0 0.0
    %1376 = vmatpush1.msra.mxu0 %v353
    %1377 = vmatprep.subr.mxu0 0.0
    %1378 = vmatpush1.msra.mxu0 %v354
    %1379 = vmatprep.subr.mxu0 0.0
    %1380 = vmatpush1.msra.mxu0 %v355
    %1381 = vmatprep.subr.mxu0 0.0
    %1382 = vmatpush1.msra.mxu0 %v356
    %1383 = vmatprep.subr.mxu0 0.0
    %1384 = vmatpush1.msra.mxu0 %v357
    %1385 = vmatprep.subr.mxu0 0.0
    %1386 = vmatpush1.msra.mxu0 %v358
    %1387 = vmatprep.subr.mxu0 0.0
    %1388 = vmatpush1.msra.mxu0 %v359
    %1389 = vmatprep.subr.mxu0 0.0
    %1390 = vmatpush1.msra.mxu0 %v360
    %1391 = vmatprep.subr.mxu0 0.0
    %1392 = vmatpush1.msra.mxu0 %v361
    %1393 = vmatprep.subr.mxu0 0.0
    %1394 = vmatpush1.msra.mxu0 %v362
    %1395 = vmatprep.mubr.f32.mxu0 %v686
    %1396 = vmatmul.mubr.f32.gmra.mrb[0].mxu0 %v678
    %v1397 = vpop.f32.mrb[0].mxu0
    %v1398 = vadd.f32 %v1328, %v1397
    %v1399 = vpop.f32.mrb[0].mxu0
    %1400 = vdwg.mxu0
    %1401 = vmatprep.subr.mxu0 0.0
    %1402 = vmatpush1.msra.mxu0 %v363
    %1403 = vmatprep.subr.mxu0 0.0
    %1404 = vmatpush1.msra.mxu0 %v364
    %1405 = vmatprep.subr.mxu0 0.0
    %1406 = vmatpush1.msra.mxu0 %v365
    %1407 = vmatprep.subr.mxu0 0.0
    %1408 = vmatpush1.msra.mxu0 %v366
    %1409 = vmatprep.subr.mxu0 0.0
    %1410 = vmatpush1.msra.mxu0 %v367
    %1411 = vmatprep.subr.mxu0 0.0
    %1412 = vmatpush1.msra.mxu0 %v368
    %1413 = vmatprep.subr.mxu0 0.0
    %1414 = vmatpush1.msra.mxu0 %v369
    %1415 = vmatprep.subr.mxu0 0.0
    %1416 = vmatpush1.msra.mxu0 %v370
    %1417 = vmatprep.subr.mxu0 0.0
    %1418 = vmatpush1.msra.mxu0 %v371
    %1419 = vmatprep.subr.mxu0 0.0
    %1420 = vmatpush1.msra.mxu0 %v372
    %1421 = vmatprep.subr.mxu0 0.0
    %1422 = vmatpush1.msra.mxu0 %v373
    %1423 = vmatprep.subr.mxu0 0.0
    %1424 = vmatpush1.msra.mxu0 %v374
    %1425 = vmatprep.subr.mxu0 0.0
    %1426 = vmatpush1.msra.mxu0 %v375
    %1427 = vmatprep.subr.mxu0 0.0
    %1428 = vmatpush1.msra.mxu0 %v376
    %1429 = vmatprep.subr.mxu0 0.0
    %1430 = vmatpush1.msra.mxu0 %v377
    %1431 = vmatprep.subr.mxu0 0.0
    %1432 = vmatpush1.msra.mxu0 %v378
    %1433 = vmatprep.subr.mxu0 0.0
    %1434 = vmatpush1.msra.mxu0 %v379
    %1435 = vmatprep.subr.mxu0 0.0
    %1436 = vmatpush1.msra.mxu0 %v380
    %1437 = vmatprep.subr.mxu0 0.0
    %1438 = vmatpush1.msra.mxu0 %v381
    %1439 = vmatprep.subr.mxu0 0.0
    %1440 = vmatpush1.msra.mxu0 %v382
    %1441 = vmatprep.subr.mxu0 0.0
    %1442 = vmatpush1.msra.mxu0 %v383
    %1443 = vmatprep.subr.mxu0 0.0
    %1444 = vmatpush1.msra.mxu0 %v384
    %1445 = vmatprep.subr.mxu0 0.0
    %1446 = vmatpush1.msra.mxu0 %v385
    %1447 = vmatprep.subr.mxu0 0.0
    %1448 = vmatpush1.msra.mxu0 %v386
    %1449 = vmatprep.subr.mxu0 0.0
    %1450 = vmatpush1.msra.mxu0 %v387
    %1451 = vmatprep.subr.mxu0 0.0
    %1452 = vmatpush1.msra.mxu0 %v388
    %1453 = vmatprep.subr.mxu0 0.0
    %1454 = vmatpush1.msra.mxu0 %v389
    %1455 = vmatprep.subr.mxu0 0.0
    %1456 = vmatpush1.msra.mxu0 %v390
    %1457 = vmatprep.subr.mxu0 0.0
    %1458 = vmatpush1.msra.mxu0 %v391
    %1459 = vmatprep.subr.mxu0 0.0
    %1460 = vmatpush1.msra.mxu0 %v392
    %1461 = vmatprep.subr.mxu0 0.0
    %1462 = vmatpush1.msra.mxu0 %v393
    %1463 = vmatprep.subr.mxu0 0.0
    %1464 = vmatpush1.msra.mxu0 %v394
    %1465 = vmatprep.mubr.f32.mxu0 %v687
    %1466 = vmatmul.mubr.f32.gmra.mrb[0].mxu0 %v685
    %v1467 = vpop.f32.mrb[0].mxu0
    %v1468 = vadd.f32 %v1398, %v1467
    %v1469 = vpop.f32.mrb[0].mxu0
    %1470 = vdwg.mxu0
    %1471 = vmatprep.subr.mxu0 0.0
    %1472 = vmatpush1.msra.mxu0 %v395
    %1473 = vmatprep.subr.mxu0 0.0
    %1474 = vmatpush1.msra.mxu0 %v396
    %1475 = vmatprep.subr.mxu0 0.0
    %1476 = vmatpush1.msra.mxu0 %v397
    %1477 = vmatprep.subr.mxu0 0.0
    %1478 = vmatpush1.msra.mxu0 %v398
    %1479 = vmatprep.subr.mxu0 0.0
    %1480 = vmatpush1.msra.mxu0 %v399
    %1481 = vmatprep.subr.mxu0 0.0
    %1482 = vmatpush1.msra.mxu0 %v400
    %1483 = vmatprep.subr.mxu0 0.0
    %1484 = vmatpush1.msra.mxu0 %v401
    %1485 = vmatprep.subr.mxu0 0.0
    %1486 = vmatpush1.msra.mxu0 %v402
    %1487 = vmatprep.subr.mxu0 0.0
    %1488 = vmatpush1.msra.mxu0 %v403
    %1489 = vmatprep.subr.mxu0 0.0
    %1490 = vmatpush1.msra.mxu0 %v404
    %1491 = vmatprep.subr.mxu0 0.0
    %1492 = vmatpush1.msra.mxu0 %v405
    %1493 = vmatprep.subr.mxu0 0.0
    %1494 = vmatpush1.msra.mxu0 %v406
    %1495 = vmatprep.subr.mxu0 0.0
    %1496 = vmatpush1.msra.mxu0 %v407
    %1497 = vmatprep.subr.mxu0 0.0
    %1498 = vmatpush1.msra.mxu0 %v408
    %1499 = vmatprep.subr.mxu0 0.0
    %1500 = vmatpush1.msra.mxu0 %v409
    %1501 = vmatprep.subr.mxu0 0.0
    %1502 = vmatpush1.msra.mxu0 %v410
    %1503 = vmatprep.subr.mxu0 0.0
    %1504 = vmatpush1.msra.mxu0 %v411
    %1505 = vmatprep.subr.mxu0 0.0
    %1506 = vmatpush1.msra.mxu0 %v412
    %1507 = vmatprep.subr.mxu0 0.0
    %1508 = vmatpush1.msra.mxu0 %v413
    %1509 = vmatprep.subr.mxu0 0.0
    %1510 = vmatpush1.msra.mxu0 %v414
    %1511 = vmatprep.subr.mxu0 0.0
    %1512 = vmatpush1.msra.mxu0 %v415
    %1513 = vmatprep.subr.mxu0 0.0
    %1514 = vmatpush1.msra.mxu0 %v416
    %1515 = vmatprep.subr.mxu0 0.0
    %1516 = vmatpush1.msra.mxu0 %v417
    %1517 = vmatprep.subr.mxu0 0.0
    %1518 = vmatpush1.msra.mxu0 %v418
    %1519 = vmatprep.subr.mxu0 0.0
    %1520 = vmatpush1.msra.mxu0 %v419
    %1521 = vmatprep.subr.mxu0 0.0
    %1522 = vmatpush1.msra.mxu0 %v420
    %1523 = vmatprep.subr.mxu0 0.0
    %1524 = vmatpush1.msra.mxu0 %v421
    %1525 = vmatprep.subr.mxu0 0.0
    %1526 = vmatpush1.msra.mxu0 %v422
    %1527 = vmatprep.subr.mxu0 0.0
    %1528 = vmatpush1.msra.mxu0 %v423
    %1529 = vmatprep.subr.mxu0 0.0
    %1530 = vmatpush1.msra.mxu0 %v424
    %1531 = vmatprep.subr.mxu0 0.0
    %1532 = vmatpush1.msra.mxu0 %v425
    %1533 = vmatprep.subr.mxu0 0.0
    %1534 = vmatpush1.msra.mxu0 %v426
    %1535 = vmatprep.mubr.f32.mxu0 %v703
    %1536 = vmatmul.mubr.f32.gmra.mrb[0].mxu0 %v695
    %v1537 = vpop.f32.mrb[0].mxu0
    %v1538 = vadd.f32 %v1468, %v1537
    %v1539 = vpop.f32.mrb[0].mxu0
    %1540 = vdwg.mxu0
    %1541 = vmatprep.subr.mxu0 0.0
    %1542 = vmatpush1.msra.mxu0 %v427
    %1543 = vmatprep.subr.mxu0 0.0
    %1544 = vmatpush1.msra.mxu0 %v428
    %1545 = vmatprep.subr.mxu0 0.0
    %1546 = vmatpush1.msra.mxu0 %v429
    %1547 = vmatprep.subr.mxu0 0.0
    %1548 = vmatpush1.msra.mxu0 %v430
    %1549 = vmatprep.subr.mxu0 0.0
    %1550 = vmatpush1.msra.mxu0 %v431
    %1551 = vmatprep.subr.mxu0 0.0
    %1552 = vmatpush1.msra.mxu0 %v432
    %1553 = vmatprep.subr.mxu0 0.0
    %1554 = vmatpush1.msra.mxu0 %v433
    %1555 = vmatprep.subr.mxu0 0.0
    %1556 = vmatpush1.msra.mxu0 %v434
    %1557 = vmatprep.subr.mxu0 0.0
    %1558 = vmatpush1.msra.mxu0 %v435
    %1559 = vmatprep.subr.mxu0 0.0
    %1560 = vmatpush1.msra.mxu0 %v436
    %1561 = vmatprep.subr.mxu0 0.0
    %1562 = vmatpush1.msra.mxu0 %v437
    %1563 = vmatprep.subr.mxu0 0.0
    %1564 = vmatpush1.msra.mxu0 %v438
    %1565 = vmatprep.subr.mxu0 0.0
    %1566 = vmatpush1.msra.mxu0 %v439
    %1567 = vmatprep.subr.mxu0 0.0
    %1568 = vmatpush1.msra.mxu0 %v440
    %1569 = vmatprep.subr.mxu0 0.0
    %1570 = vmatpush1.msra.mxu0 %v441
    %1571 = vmatprep.subr.mxu0 0.0
    %1572 = vmatpush1.msra.mxu0 %v442
    %1573 = vmatprep.subr.mxu0 0.0
    %1574 = vmatpush1.msra.mxu0 %v443
    %1575 = vmatprep.subr.mxu0 0.0
    %1576 = vmatpush1.msra.mxu0 %v444
    %1577 = vmatprep.subr.mxu0 0.0
    %1578 = vmatpush1.msra.mxu0 %v445
    %1579 = vmatprep.subr.mxu0 0.0
    %1580 = vmatpush1.msra.mxu0 %v446
    %1581 = vmatprep.subr.mxu0 0.0
    %1582 = vmatpush1.msra.mxu0 %v447
    %1583 = vmatprep.subr.mxu0 0.0
    %1584 = vmatpush1.msra.mxu0 %v448
    %1585 = vmatprep.subr.mxu0 0.0
    %1586 = vmatpush1.msra.mxu0 %v449
    %1587 = vmatprep.subr.mxu0 0.0
    %1588 = vmatpush1.msra.mxu0 %v450
    %1589 = vmatprep.subr.mxu0 0.0
    %1590 = vmatpush1.msra.mxu0 %v451
    %1591 = vmatprep.subr.mxu0 0.0
    %1592 = vmatpush1.msra.mxu0 %v452
    %1593 = vmatprep.subr.mxu0 0.0
    %1594 = vmatpush1.msra.mxu0 %v453
    %1595 = vmatprep.subr.mxu0 0.0
    %1596 = vmatpush1.msra.mxu0 %v454
    %1597 = vmatprep.subr.mxu0 0.0
    %1598 = vmatpush1.msra.mxu0 %v455
    %1599 = vmatprep.subr.mxu0 0.0
    %1600 = vmatpush1.msra.mxu0 %v456
    %1601 = vmatprep.subr.mxu0 0.0
    %1602 = vmatpush1.msra.mxu0 %v457
    %1603 = vmatprep.subr.mxu0 0.0
    %1604 = vmatpush1.msra.mxu0 %v458
    %1605 = vmatprep.mubr.f32.mxu0 %v704
    %1606 = vmatmul.mubr.f32.gmra.mrb[0].mxu0 %v702
    %v1607 = vpop.f32.mrb[0].mxu0
    %v1608 = vadd.f32 %v1538, %v1607
    %v1609 = vpop.f32.mrb[0].mxu0
    %1610 = vdwg.mxu0
    %1611 = vmatprep.subr.mxu0 0.0
    %1612 = vmatpush1.msra.mxu0 %v459
    %1613 = vmatprep.subr.mxu0 0.0
    %1614 = vmatpush1.msra.mxu0 %v460
    %1615 = vmatprep.subr.mxu0 0.0
    %1616 = vmatpush1.msra.mxu0 %v461
    %1617 = vmatprep.subr.mxu0 0.0
    %1618 = vmatpush1.msra.mxu0 %v462
    %1619 = vmatprep.subr.mxu0 0.0
    %1620 = vmatpush1.msra.mxu0 %v463
    %1621 = vmatprep.subr.mxu0 0.0
    %1622 = vmatpush1.msra.mxu0 %v464
    %1623 = vmatprep.subr.mxu0 0.0
    %1624 = vmatpush1.msra.mxu0 %v465
    %1625 = vmatprep.subr.mxu0 0.0
    %1626 = vmatpush1.msra.mxu0 %v466
    %1627 = vmatprep.subr.mxu0 0.0
    %1628 = vmatpush1.msra.mxu0 %v467
    %1629 = vmatprep.subr.mxu0 0.0
    %1630 = vmatpush1.msra.mxu0 %v468
    %1631 = vmatprep.subr.mxu0 0.0
    %1632 = vmatpush1.msra.mxu0 %v469
    %1633 = vmatprep.subr.mxu0 0.0
    %1634 = vmatpush1.msra.mxu0 %v470
    %1635 = vmatprep.subr.mxu0 0.0
    %1636 = vmatpush1.msra.mxu0 %v471
    %1637 = vmatprep.subr.mxu0 0.0
    %1638 = vmatpush1.msra.mxu0 %v472
    %1639 = vmatprep.subr.mxu0 0.0
    %1640 = vmatpush1.msra.mxu0 %v473
    %1641 = vmatprep.subr.mxu0 0.0
    %1642 = vmatpush1.msra.mxu0 %v474
    %1643 = vmatprep.subr.mxu0 0.0
    %1644 = vmatpush1.msra.mxu0 %v475
    %1645 = vmatprep.subr.mxu0 0.0
    %1646 = vmatpush1.msra.mxu0 %v476
    %1647 = vmatprep.subr.mxu0 0.0
    %1648 = vmatpush1.msra.mxu0 %v477
    %1649 = vmatprep.subr.mxu0 0.0
    %1650 = vmatpush1.msra.mxu0 %v478
    %1651 = vmatprep.subr.mxu0 0.0
    %1652 = vmatpush1.msra.mxu0 %v479
    %1653 = vmatprep.subr.mxu0 0.0
    %1654 = vmatpush1.msra.mxu0 %v480
    %1655 = vmatprep.subr.mxu0 0.0
    %1656 = vmatpush1.msra.mxu0 %v481
    %1657 = vmatprep.subr.mxu0 0.0
    %1658 = vmatpush1.msra.mxu0 %v482
    %1659 = vmatprep.subr.mxu0 0.0
    %1660 = vmatpush1.msra.mxu0 %v483
    %1661 = vmatprep.subr.mxu0 0.0
    %1662 = vmatpush1.msra.mxu0 %v484
    %1663 = vmatprep.subr.mxu0 0.0
    %1664 = vmatpush1.msra.mxu0 %v485
    %1665 = vmatprep.subr.mxu0 0.0
    %1666 = vmatpush1.msra.mxu0 %v486
    %1667 = vmatprep.subr.mxu0 0.0
    %1668 = vmatpush1.msra.mxu0 %v487
    %1669 = vmatprep.subr.mxu0 0.0
    %1670 = vmatpush1.msra.mxu0 %v488
    %1671 = vmatprep.subr.mxu0 0.0
    %1672 = vmatpush1.msra.mxu0 %v489
    %1673 = vmatprep.subr.mxu0 0.0
    %1674 = vmatpush1.msra.mxu0 %v490
    %1675 = vmatprep.mubr.f32.mxu0 %v720
    %1676 = vmatmul.mubr.f32.gmra.mrb[0].mxu0 %v712
    %v1677 = vpop.f32.mrb[0].mxu0
    %v1678 = vadd.f32 %v1608, %v1677
    %v1679 = vpop.f32.mrb[0].mxu0
    %1680 = vdwg.mxu0
    %1681 = vmatprep.subr.mxu0 0.0
    %1682 = vmatpush1.msra.mxu0 %v491
    %1683 = vmatprep.subr.mxu0 0.0
    %1684 = vmatpush1.msra.mxu0 %v492
    %1685 = vmatprep.subr.mxu0 0.0
    %1686 = vmatpush1.msra.mxu0 %v493
    %1687 = vmatprep.subr.mxu0 0.0
    %1688 = vmatpush1.msra.mxu0 %v494
    %1689 = vmatprep.subr.mxu0 0.0
    %1690 = vmatpush1.msra.mxu0 %v495
    %1691 = vmatprep.subr.mxu0 0.0
    %1692 = vmatpush1.msra.mxu0 %v496
    %1693 = vmatprep.subr.mxu0 0.0
    %1694 = vmatpush1.msra.mxu0 %v497
    %1695 = vmatprep.subr.mxu0 0.0
    %1696 = vmatpush1.msra.mxu0 %v498
    %1697 = vmatprep.subr.mxu0 0.0
    %1698 = vmatpush1.msra.mxu0 %v499
    %1699 = vmatprep.subr.mxu0 0.0
    %1700 = vmatpush1.msra.mxu0 %v500
    %1701 = vmatprep.subr.mxu0 0.0
    %1702 = vmatpush1.msra.mxu0 %v501
    %1703 = vmatprep.subr.mxu0 0.0
    %1704 = vmatpush1.msra.mxu0 %v502
    %1705 = vmatprep.subr.mxu0 0.0
    %1706 = vmatpush1.msra.mxu0 %v503
    %1707 = vmatprep.subr.mxu0 0.0
    %1708 = vmatpush1.msra.mxu0 %v504
    %1709 = vmatprep.subr.mxu0 0.0
    %1710 = vmatpush1.msra.mxu0 %v505
    %1711 = vmatprep.subr.mxu0 0.0
    %1712 = vmatpush1.msra.mxu0 %v506
    %1713 = vmatprep.subr.mxu0 0.0
    %1714 = vmatpush1.msra.mxu0 %v507
    %1715 = vmatprep.subr.mxu0 0.0
    %1716 = vmatpush1.msra.mxu0 %v508
    %1717 = vmatprep.subr.mxu0 0.0
    %1718 = vmatpush1.msra.mxu0 %v509
    %1719 = vmatprep.subr.mxu0 0.0
    %1720 = vmatpush1.msra.mxu0 %v510
    %1721 = vmatprep.subr.mxu0 0.0
    %1722 = vmatpush1.msra.mxu0 %v511
    %1723 = vmatprep.subr.mxu0 0.0
    %1724 = vmatpush1.msra.mxu0 %v512
    %1725 = vmatprep.subr.mxu0 0.0
    %1726 = vmatpush1.msra.mxu0 %v513
    %1727 = vmatprep.subr.mxu0 0.0
    %1728 = vmatpush1.msra.mxu0 %v514
    %1729 = vmatprep.subr.mxu0 0.0
    %1730 = vmatpush1.msra.mxu0 %v515
    %1731 = vmatprep.subr.mxu0 0.0
    %1732 = vmatpush1.msra.mxu0 %v516
    %1733 = vmatprep.subr.mxu0 0.0
    %1734 = vmatpush1.msra.mxu0 %v517
    %1735 = vmatprep.subr.mxu0 0.0
    %1736 = vmatpush1.msra.mxu0 %v518
    %1737 = vmatprep.subr.mxu0 0.0
    %1738 = vmatpush1.msra.mxu0 %v519
    %1739 = vmatprep.subr.mxu0 0.0
    %1740 = vmatpush1.msra.mxu0 %v520
    %1741 = vmatprep.subr.mxu0 0.0
    %1742 = vmatpush1.msra.mxu0 %v521
    %1743 = vmatprep.subr.mxu0 0.0
    %1744 = vmatpush1.msra.mxu0 %v522
    %1745 = vmatprep.mubr.f32.mxu0 %v721
    %1746 = vmatmul.mubr.f32.gmra.mrb[0].mxu0 %v719
    %v1747 = vpop.f32.mrb[0].mxu0
    %v1748 = vadd.f32 %v1678, %v1747
    %v1749 = vpop.f32.mrb[0].mxu0
    %1750 = vdwg.mxu0
    %1751 = vmatprep.subr.mxu0 0.0
    %1752 = vmatpush1.msra.mxu0 %v523
    %1753 = vmatprep.subr.mxu0 0.0
    %1754 = vmatpush1.msra.mxu0 %v524
    %1755 = vmatprep.subr.mxu0 0.0
    %1756 = vmatpush1.msra.mxu0 %v525
    %1757 = vmatprep.subr.mxu0 0.0
    %1758 = vmatpush1.msra.mxu0 %v526
    %1759 = vmatprep.subr.mxu0 0.0
    %1760 = vmatpush1.msra.mxu0 %v527
    %1761 = vmatprep.subr.mxu0 0.0
    %1762 = vmatpush1.msra.mxu0 %v528
    %1763 = vmatprep.subr.mxu0 0.0
    %1764 = vmatpush1.msra.mxu0 %v529
    %1765 = vmatprep.subr.mxu0 0.0
    %1766 = vmatpush1.msra.mxu0 %v530
    %1767 = vmatprep.subr.mxu0 0.0
    %1768 = vmatpush1.msra.mxu0 %v531
    %1769 = vmatprep.subr.mxu0 0.0
    %1770 = vmatpush1.msra.mxu0 %v532
    %1771 = vmatprep.subr.mxu0 0.0
    %1772 = vmatpush1.msra.mxu0 %v533
    %1773 = vmatprep.subr.mxu0 0.0
    %1774 = vmatpush1.msra.mxu0 %v534
    %1775 = vmatprep.subr.mxu0 0.0
    %1776 = vmatpush1.msra.mxu0 %v535
    %1777 = vmatprep.subr.mxu0 0.0
    %1778 = vmatpush1.msra.mxu0 %v536
    %1779 = vmatprep.subr.mxu0 0.0
    %1780 = vmatpush1.msra.mxu0 %v537
    %1781 = vmatprep.subr.mxu0 0.0
    %1782 = vmatpush1.msra.mxu0 %v538
    %1783 = vmatprep.subr.mxu0 0.0
    %1784 = vmatpush1.msra.mxu0 %v539
    %1785 = vmatprep.subr.mxu0 0.0
    %1786 = vmatpush1.msra.mxu0 %v540
    %1787 = vmatprep.subr.mxu0 0.0
    %1788 = vmatpush1.msra.mxu0 %v541
    %1789 = vmatprep.subr.mxu0 0.0
    %1790 = vmatpush1.msra.mxu0 %v542
    %1791 = vmatprep.subr.mxu0 0.0
    %1792 = vmatpush1.msra.mxu0 %v543
    %1793 = vmatprep.subr.mxu0 0.0
    %1794 = vmatpush1.msra.mxu0 %v544
    %1795 = vmatprep.subr.mxu0 0.0
    %1796 = vmatpush1.msra.mxu0 %v545
    %1797 = vmatprep.subr.mxu0 0.0
    %1798 = vmatpush1.msra.mxu0 %v546
    %1799 = vmatprep.subr.mxu0 0.0
    %1800 = vmatpush1.msra.mxu0 %v547
    %1801 = vmatprep.subr.mxu0 0.0
    %1802 = vmatpush1.msra.mxu0 %v548
    %1803 = vmatprep.subr.mxu0 0.0
    %1804 = vmatpush1.msra.mxu0 %v549
    %1805 = vmatprep.subr.mxu0 0.0
    %1806 = vmatpush1.msra.mxu0 %v550
    %1807 = vmatprep.subr.mxu0 0.0
    %1808 = vmatpush1.msra.mxu0 %v551
    %1809 = vmatprep.subr.mxu0 0.0
    %1810 = vmatpush1.msra.mxu0 %v552
    %1811 = vmatprep.subr.mxu0 0.0
    %1812 = vmatpush1.msra.mxu0 %v553
    %1813 = vmatprep.subr.mxu0 0.0
    %1814 = vmatpush1.msra.mxu0 %v554
    %1815 = vmatprep.mubr.f32.mxu0 %v737
    %1816 = vmatmul.mubr.f32.gmra.mrb[0].mxu0 %v729
    %v1817 = vpop.f32.mrb[0].mxu0
    %v1818 = vadd.f32 %v1748, %v1817
    %v1819 = vpop.f32.mrb[0].mxu0
    %1820 = vdwg.mxu0
    %1821 = vmatprep.subr.mxu0 0.0
    %1822 = vmatpush1.msra.mxu0 %v555
    %1823 = vmatprep.subr.mxu0 0.0
    %1824 = vmatpush1.msra.mxu0 %v556
    %1825 = vmatprep.subr.mxu0 0.0
    %1826 = vmatpush1.msra.mxu0 %v557
    %1827 = vmatprep.subr.mxu0 0.0
    %1828 = vmatpush1.msra.mxu0 %v558
    %1829 = vmatprep.subr.mxu0 0.0
    %1830 = vmatpush1.msra.mxu0 %v559
    %1831 = vmatprep.subr.mxu0 0.0
    %1832 = vmatpush1.msra.mxu0 %v560
    %1833 = vmatprep.subr.mxu0 0.0
    %1834 = vmatpush1.msra.mxu0 %v561
    %1835 = vmatprep.subr.mxu0 0.0
    %1836 = vmatpush1.msra.mxu0 %v562
    %1837 = vmatprep.subr.mxu0 0.0
    %1838 = vmatpush1.msra.mxu0 %v563
    %1839 = vmatprep.subr.mxu0 0.0
    %1840 = vmatpush1.msra.mxu0 %v564
    %1841 = vmatprep.subr.mxu0 0.0
    %1842 = vmatpush1.msra.mxu0 %v565
    %1843 = vmatprep.subr.mxu0 0.0
    %1844 = vmatpush1.msra.mxu0 %v566
    %1845 = vmatprep.subr.mxu0 0.0
    %1846 = vmatpush1.msra.mxu0 %v567
    %1847 = vmatprep.subr.mxu0 0.0
    %1848 = vmatpush1.msra.mxu0 %v568
    %1849 = vmatprep.subr.mxu0 0.0
    %1850 = vmatpush1.msra.mxu0 %v569
    %1851 = vmatprep.subr.mxu0 0.0
    %1852 = vmatpush1.msra.mxu0 %v570
    %1853 = vmatprep.subr.mxu0 0.0
    %1854 = vmatpush1.msra.mxu0 %v571
    %1855 = vmatprep.subr.mxu0 0.0
    %1856 = vmatpush1.msra.mxu0 %v572
    %1857 = vmatprep.subr.mxu0 0.0
    %1858 = vmatpush1.msra.mxu0 %v573
    %1859 = vmatprep.subr.mxu0 0.0
    %1860 = vmatpush1.msra.mxu0 %v574
    %1861 = vmatprep.subr.mxu0 0.0
    %1862 = vmatpush1.msra.mxu0 %v575
    %1863 = vmatprep.subr.mxu0 0.0
    %1864 = vmatpush1.msra.mxu0 %v576
    %1865 = vmatprep.subr.mxu0 0.0
    %1866 = vmatpush1.msra.mxu0 %v577
    %1867 = vmatprep.subr.mxu0 0.0
    %1868 = vmatpush1.msra.mxu0 %v578
    %1869 = vmatprep.subr.mxu0 0.0
    %1870 = vmatpush1.msra.mxu0 %v579
    %1871 = vmatprep.subr.mxu0 0.0
    %1872 = vmatpush1.msra.mxu0 %v580
    %1873 = vmatprep.subr.mxu0 0.0
    %1874 = vmatpush1.msra.mxu0 %v581
    %1875 = vmatprep.subr.mxu0 0.0
    %1876 = vmatpush1.msra.mxu0 %v582
    %1877 = vmatprep.subr.mxu0 0.0
    %1878 = vmatpush1.msra.mxu0 %v583
    %1879 = vmatprep.subr.mxu0 0.0
    %1880 = vmatpush1.msra.mxu0 %v584
    %1881 = vmatprep.subr.mxu0 0.0
    %1882 = vmatpush1.msra.mxu0 %v585
    %1883 = vmatprep.subr.mxu0 0.0
    %1884 = vmatpush1.msra.mxu0 %v586
    %1885 = vmatprep.mubr.f32.mxu0 %v738
    %1886 = vmatmul.mubr.f32.gmra.mrb[0].mxu0 %v736
    %v1887 = vpop.f32.mrb[0].mxu0
    %v1888 = vadd.f32 %v1818, %v1887
    %v1889 = vpop.f32.mrb[0].mxu0
    %1890 = vdwg.mxu0
    %v1891 = vld [vmem:[#allocation7] sm:$0x1]
    %v1893 = vlaneseq
    %v1894 = vshrl.u32 %v1893, 7
    %v1895 = vsub.s32 0, %v1894
    %v1896 = vrot.slane %v1891, %v1895
    %v1898 = vmul.f32 %v1888, %v1896
    %v1899 = vld [vmem:[#allocation8] sm:$0x1]
    %v1901 = vlaneseq
    %v1902 = vshrl.u32 %v1901, 7
    %v1903 = vsub.s32 0, %v1902
    %v1904 = vrot.slane %v1899, %v1903
    %v1906 = vadd.f32 %v1898, %v1904
    %1907 = vst [vmem:[#allocation10] sm:$0x3] %v1906
    // Predicated region
    $region34: #{tpu_custom_call.1} parent=1 // pred_check
      _
    $region35: #{tpu_custom_call.1} parent=1 // pred_check_branch
      %1909 = sbr.rel (0) target = $region37
    $region36: #{tpu_custom_call.1} parent=1 // pred_region
      %s1911 = ssub.s32 32, 32
      %1912 = vsyncadd [#allocation4], %s1911
      %s1914 = sshll.u32 [#allocation10], 4
      %s1915 = int_to_ptr.vmem [resolvable:$true] %s1914
      %1917 = dma.vmem_to_hbm [thread:$0]  %s1915, 32, %s4, [#allocation4]
    $region37: #{tpu_custom_call.1} parent=1 // pred_fallthru
      _
    // Predicated region
    $region38: #{tpu_custom_call.1} parent=1 // pred_check
      _
    $region39: #{tpu_custom_call.1} parent=1 // pred_check_branch
      %1919 = sbr.rel (0) target = $region41
    $region40: #{tpu_custom_call.1} parent=1 // pred_region
      %1920 = dma.done [#allocation4], 32
    $region41: #{tpu_custom_call.1} parent=1 // pred_fallthru
      _
    %1921 = vsyncpa [#allocation3], 1
    %1922 = vsyncpa [#allocation6], 1
    %1923 = vsyncpa [#allocation9], 1
    %1924 = vsyncpa [#allocation4], 1

</llo_original>
